<compile_context>
chip_gen: v6e
topology: v6e:2x2x1
jax: 0.10.0
libtpu: 0.0.40
codegen_flags: <defaults>
</compile_context>

<pallas_src>
import functools

import jax
import jax.numpy as jnp
from jax import lax
from jax.experimental import pallas as pl
from jax.experimental.pallas import tpu as pltpu

K = 7      # conv kernel size
PAD = 3    # conv padding
# The pooled maps are written into a zeroed scratch at an (8, 128)-aligned offset so the
# partial store stays aligned; the zero border around them supplies the conv padding.
R0 = 8     # sublane-aligned row offset  (>= PAD)
C0 = 128   # lane-aligned column offset  (>= PAD)


def _spatial_attention_kernel(params_ref, x_ref, o_ref,
                              sum_ref, max_ref, pad_a_ref, pad_m_ref,
                              *, H, W, C):
    """Grid = (B, C // TC); channel axis last ('arbitrary').

    params_ref : SMEM (2*K*K + 1,) f32  -> [w_avg(49), w_max(49), bias]
    x_ref      : VMEM (1, TC, H, W) channel tile of the *unpadded* input
    o_ref      : VMEM (1, H, W)
    sum_ref    : VMEM (H, W) f32 running channel sum
    max_ref    : VMEM (H, W) f32 running channel max
    pad_*_ref  : VMEM (R0+H+PAD, C0+W+PAD) f32 zero-bordered pooled maps
    """
    c = pl.program_id(1)

    xb = x_ref[0].astype(jnp.float32)          # (TC, H, W) -- accumulate in f32
    part_sum = jnp.sum(xb, axis=0)             # (H, W)
    part_max = jnp.max(xb, axis=0)             # (H, W)

    @pl.when(c == 0)
    def _():
        sum_ref[...] = jnp.zeros_like(sum_ref)
        max_ref[...] = jnp.full_like(max_ref, -jnp.inf)

    sum_ref[...] = sum_ref[...] + part_sum
    max_ref[...] = jnp.maximum(max_ref[...], part_max)

    @pl.when(c == pl.num_programs(1) - 1)
    def _():
        avg = sum_ref[...] * jnp.float32(1.0 / C)
        mx = max_ref[...]

        # Zero-pad the pooled maps (== the reference conv's zero padding: mean(0)=0 and
        # the border of the max map is 0 by construction).  Stores are at aligned
        # (sublane multiple of 8, lane multiple of 128) offsets.
        pad_a_ref[...] = jnp.zeros_like(pad_a_ref)
        pad_m_ref[...] = jnp.zeros_like(pad_m_ref)
        pad_a_ref[R0:R0 + H, C0:C0 + W] = avg
        pad_m_ref[R0:R0 + H, C0:C0 + W] = mx

        wp = W + 2 * PAD
        avg_p = lax.slice(pad_a_ref[...], (R0 - PAD, C0 - PAD),
                          (R0 + H + PAD, C0 + W + PAD))       # (H+6, W+6)
        mx_p = lax.slice(pad_m_ref[...], (R0 - PAD, C0 - PAD),
                         (R0 + H + PAD, C0 + W + PAD))        # (H+6, W+6)

        # Hoist the row (ky) shifts: 7 sublane-offset views per pooled map.
        avg_rows = [lax.slice(avg_p, (ky, 0), (ky + H, wp)) for ky in range(K)]
        mx_rows = [lax.slice(mx_p, (ky, 0), (ky + H, wp)) for ky in range(K)]

        # Per column-offset partial sums: 7 independent accumulation chains (ILP for the
        # 4 VALU slots); all MACs run at full padded width, so no cross-lane work here.
        cols = []
        for kx in range(K):
            p = (params_ref[kx] * avg_rows[0]
                 + params_ref[K * K + kx] * mx_rows[0])
            for ky in range(1, K):
                p = (p + params_ref[ky * K + kx] * avg_rows[ky]
                     + params_ref[K * K + ky * K + kx] * mx_rows[ky])
            cols.append(p)                                    # (H, W+6)

        # Only 7 lane-offset slices (was 98) realize the column shifts.
        acc = jnp.full((H, W), params_ref[2 * K * K], dtype=jnp.float32)  # bias
        for kx in range(K):
            acc = acc + lax.slice(cols[kx], (0, kx), (H, kx + W))

        # Note: output last dim (W) may be < 128 -> masked store; output traffic is
        # 1/C of the input so this is not worth an in-kernel relayout to flatten.
        o_ref[0] = jax.nn.sigmoid(acc).astype(o_ref.dtype)


def _pick_channel_tile(C, H, W, budget_bytes=2 * 1024 * 1024):
    """Largest divisor of C whose (TC, H, W) f32 tile fits `budget_bytes` (v7x-safe)."""
    bytes_per_channel = H * W * 4
    max_tc = max(1, budget_bytes // bytes_per_channel)
    for d in range(min(C, max_tc), 0, -1):
        if C % d == 0:
            return d
    return 1


def spatial_attention(x, weight, bias):
    """x: (B, C, H, W); weight: (1, 2, K, K); bias: (1,). Returns (B, 1, H, W)."""
    B, C, H, W = x.shape
    tc = _pick_channel_tile(C, H, W)
    n_c = C // tc

    # Flatten conv params into one SMEM scalar table: [w_avg(49), w_max(49), bias].
    params = jnp.concatenate(
        [weight[0, 0].reshape(-1), weight[0, 1].reshape(-1), bias.reshape(-1)]
    ).astype(jnp.float32)

    kernel = functools.partial(_spatial_attention_kernel, H=H, W=W, C=C)
    out = pl.pallas_call(
        kernel,
        out_shape=jax.ShapeDtypeStruct((B, H, W), x.dtype),
        grid=(B, n_c),
        in_specs=[
            pl.BlockSpec(memory_space=pltpu.MemorySpace.SMEM),        # conv params
            pl.BlockSpec((1, tc, H, W), lambda b, c: (b, c, 0, 0)),   # unpadded input tile
        ],
        out_specs=pl.BlockSpec((1, H, W), lambda b, c: (b, 0, 0)),
        scratch_shapes=[
            pltpu.VMEM((H, W), jnp.float32),                          # running channel sum
            pltpu.VMEM((H, W), jnp.float32),                          # running channel max
            pltpu.VMEM((R0 + H + PAD, C0 + W + PAD), jnp.float32),    # padded avg map
            pltpu.VMEM((R0 + H + PAD, C0 + W + PAD), jnp.float32),    # padded max map
        ],
        compiler_params=pltpu.CompilerParams(
            dimension_semantics=("parallel", "arbitrary")),
    )(params, x)
    # TODO(synk): on v7x with B == 1 the second TensorCore idles; a halo-aware H split
    # (parallel row-tile axis) would be needed to use both cores.
    return out[:, None, :, :]


def _reference(x, weight, bias):
    avg = jnp.mean(x, axis=1, keepdims=True)
    mx = jnp.max(x, axis=1, keepdims=True)
    cat = jnp.concatenate([avg, mx], axis=1)
    out = lax.conv_general_dilated(
        cat, weight, window_strides=(1, 1), padding=((PAD, PAD), (PAD, PAD)),
        dimension_numbers=("NCHW", "OIHW", "NCHW"))
    return jax.nn.sigmoid(out + bias.reshape(1, 1, 1, 1))


if __name__ == "__main__":
    B, C, H, W = 2, 4, 16, 16
    key = jax.random.PRNGKey(0)
    kx, kw, kb = jax.random.split(key, 3)

    x = jax.random.normal(kx, (B, C, H, W), dtype=jnp.float32)

    # Deterministic init mimicking nn.Conv2d default (uniform(-1/sqrt(fan_in), 1/sqrt(fan_in))).
    fan_in = 2 * K * K
    bound = 1.0 / (fan_in ** 0.5)
    weight = jax.random.uniform(kw, (1, 2, K, K), minval=-bound, maxval=bound,
                                dtype=jnp.float32)
    bias = jax.random.uniform(kb, (1,), minval=-bound, maxval=bound,
                              dtype=jnp.float32)

    out = jax.block_until_ready(spatial_attention(x, weight, bias))
    ref = _reference(x, weight, bias)

    assert out.shape == (B, 1, H, W), out.shape
    assert jnp.allclose(out, ref, atol=1e-5, rtol=1e-5), float(jnp.max(jnp.abs(out - ref)))
    print("KERNEL_OK")
</pallas_src>

<mosaic_0001>
module attributes {stable_mosaic.version = 11 : i64} {
  func.func @_spatial_attention_kernel(%arg0: i32, %arg1: i32, %arg2: memref<99xf32, #tpu.memory_space<smem>>, %arg3: memref<1x4x16x16xf32, #tpu.memory_space<vmem>>, %arg4: memref<1x16x16xf32, #tpu.memory_space<vmem>>, %arg5: memref<16x16xf32, #tpu.memory_space<vmem>>, %arg6: memref<16x16xf32, #tpu.memory_space<vmem>>, %arg7: memref<27x147xf32, #tpu.memory_space<vmem>>, %arg8: memref<27x147xf32, #tpu.memory_space<vmem>>) attributes {dimension_semantics = [#tpu.dimension_semantics<parallel>, #tpu.dimension_semantics<arbitrary>], iteration_bounds = array<i64: 2, 1>, scalar_prefetch = 0 : i64, scratch_operands = 4 : i64, tpu.core_type = #tpu.core_type<tc>, window_params = [{transform_indices = @transform_0, window_bounds = array<i64: 99>}, {transform_indices = @transform_1, window_bounds = array<i64: 1, 4, 16, 16>}, {transform_indices = @transform_2, window_bounds = array<i64: 1, 16, 16>}]} {
    %c0 = arith.constant 0 : index
    %c0_0 = arith.constant 0 : index
    %c0_1 = arith.constant 0 : index
    %c0_2 = arith.constant 0 : index
    %0 = vector.load %arg3[%c0, %c0_0, %c0_1, %c0_2] : memref<1x4x16x16xf32, #tpu.memory_space<vmem>>, vector<1x4x16x16xf32>
    %1 = vector.shape_cast %0 : vector<1x4x16x16xf32> to vector<4x16x16xf32>
    %cst = arith.constant dense<0.000000e+00> : vector<16x16xf32>
    %2 = vector.multi_reduction <add>, %1, %cst [0] : vector<4x16x16xf32> to vector<16x16xf32>
    %cst_3 = arith.constant dense<0xFF800000> : vector<16x16xf32>
    %3 = vector.multi_reduction <maximumf>, %1, %cst_3 [0] : vector<4x16x16xf32> to vector<16x16xf32>
    %c0_i32 = arith.constant 0 : i32
    %4 = arith.cmpi eq, %arg1, %c0_i32 : i32
    %5 = arith.extui %4 : i1 to i32
    %c0_i32_4 = arith.constant 0 : i32
    %6 = arith.cmpi ne, %5, %c0_i32_4 : i32
    scf.if %6 {
      %cst_15 = arith.constant 0.000000e+00 : f32
      %16 = vector.broadcast %cst_15 : f32 to vector<16x16xf32>
      %c0_16 = arith.constant 0 : index
      %c0_17 = arith.constant 0 : index
      %17 = vector.load %arg5[%c0_16, %c0_17] : memref<16x16xf32, #tpu.memory_space<vmem>>, vector<16x16xf32>
      tpu.vector_store %arg5[%c0_16, %c0_17], %16 {strides = array<i32>} : memref<16x16xf32, #tpu.memory_space<vmem>>, vector<16x16xf32>,
      %cst_18 = arith.constant 0xFF800000 : f32
      %18 = vector.broadcast %cst_18 : f32 to vector<16x16xf32>
      %c0_19 = arith.constant 0 : index
      %c0_20 = arith.constant 0 : index
      %19 = vector.load %arg6[%c0_19, %c0_20] : memref<16x16xf32, #tpu.memory_space<vmem>>, vector<16x16xf32>
      tpu.vector_store %arg6[%c0_19, %c0_20], %18 {strides = array<i32>} : memref<16x16xf32, #tpu.memory_space<vmem>>, vector<16x16xf32>,
    } else {
    }
    %c0_5 = arith.constant 0 : index
    %c0_6 = arith.constant 0 : index
    %7 = vector.load %arg5[%c0_5, %c0_6] : memref<16x16xf32, #tpu.memory_space<vmem>>, vector<16x16xf32>
    %8 = arith.addf %7, %2 : vector<16x16xf32>
    %c0_7 = arith.constant 0 : index
    %c0_8 = arith.constant 0 : index
    %9 = vector.load %arg5[%c0_7, %c0_8] : memref<16x16xf32, #tpu.memory_space<vmem>>, vector<16x16xf32>
    tpu.vector_store %arg5[%c0_7, %c0_8], %8 {strides = array<i32>} : memref<16x16xf32, #tpu.memory_space<vmem>>, vector<16x16xf32>,
    %c0_9 = arith.constant 0 : index
    %c0_10 = arith.constant 0 : index
    %10 = vector.load %arg6[%c0_9, %c0_10] : memref<16x16xf32, #tpu.memory_space<vmem>>, vector<16x16xf32>
    %11 = arith.maximumf %10, %3 : vector<16x16xf32>
    %c0_11 = arith.constant 0 : index
    %c0_12 = arith.constant 0 : index
    %12 = vector.load %arg6[%c0_11, %c0_12] : memref<16x16xf32, #tpu.memory_space<vmem>>, vector<16x16xf32>
    tpu.vector_store %arg6[%c0_11, %c0_12], %11 {strides = array<i32>} : memref<16x16xf32, #tpu.memory_space<vmem>>, vector<16x16xf32>,
    %c0_i32_13 = arith.constant 0 : i32
    %13 = arith.cmpi eq, %arg1, %c0_i32_13 : i32
    %14 = arith.extui %13 : i1 to i32
    %c0_i32_14 = arith.constant 0 : i32
    %15 = arith.cmpi ne, %14, %c0_i32_14 : i32
    scf.if %15 {
      %c0_15 = arith.constant 0 : index
      %c0_16 = arith.constant 0 : index
      %16 = vector.load %arg5[%c0_15, %c0_16] : memref<16x16xf32, #tpu.memory_space<vmem>>, vector<16x16xf32>
      %cst_17 = arith.constant 2.500000e-01 : f32
      %17 = vector.broadcast %cst_17 : f32 to vector<16x16xf32>
      %18 = arith.mulf %16, %17 : vector<16x16xf32>
      %c0_18 = arith.constant 0 : index
      %c0_19 = arith.constant 0 : index
      %19 = vector.load %arg6[%c0_18, %c0_19] : memref<16x16xf32, #tpu.memory_space<vmem>>, vector<16x16xf32>
      %cst_20 = arith.constant 0.000000e+00 : f32
      %20 = vector.broadcast %cst_20 : f32 to vector<27x147xf32>
      %c0_21 = arith.constant 0 : index
      %c0_22 = arith.constant 0 : index
      %21 = vector.load %arg7[%c0_21, %c0_22] : memref<27x147xf32, #tpu.memory_space<vmem>>, vector<27x147xf32>
      tpu.vector_store %arg7[%c0_21, %c0_22], %20 {strides = array<i32>} : memref<27x147xf32, #tpu.memory_space<vmem>>, vector<27x147xf32>,
      %cst_23 = arith.constant 0.000000e+00 : f32
      %22 = vector.broadcast %cst_23 : f32 to vector<27x147xf32>
      %c0_24 = arith.constant 0 : index
      %c0_25 = arith.constant 0 : index
      %23 = vector.load %arg8[%c0_24, %c0_25] : memref<27x147xf32, #tpu.memory_space<vmem>>, vector<27x147xf32>
      tpu.vector_store %arg8[%c0_24, %c0_25], %22 {strides = array<i32>} : memref<27x147xf32, #tpu.memory_space<vmem>>, vector<27x147xf32>,
      %c8 = arith.constant 8 : index
      %c128 = arith.constant 128 : index
      %24 = vector.load %arg7[%c8, %c128] : memref<27x147xf32, #tpu.memory_space<vmem>>, vector<16x16xf32>
      tpu.vector_store %arg7[%c8, %c128], %18 {strides = array<i32>} : memref<27x147xf32, #tpu.memory_space<vmem>>, vector<16x16xf32>,
      %c8_26 = arith.constant 8 : index
      %c128_27 = arith.constant 128 : index
      %25 = vector.load %arg8[%c8_26, %c128_27] : memref<27x147xf32, #tpu.memory_space<vmem>>, vector<16x16xf32>
      tpu.vector_store %arg8[%c8_26, %c128_27], %19 {strides = array<i32>} : memref<27x147xf32, #tpu.memory_space<vmem>>, vector<16x16xf32>,
      %c0_28 = arith.constant 0 : index
      %c0_29 = arith.constant 0 : index
      %26 = vector.load %arg7[%c0_28, %c0_29] : memref<27x147xf32, #tpu.memory_space<vmem>>, vector<27x147xf32>
      %27 = vector.extract_strided_slice %26 {offsets = [5, 125], sizes = [22, 22], strides = [1, 1]} : vector<27x147xf32> to vector<22x22xf32>
      %c0_30 = arith.constant 0 : index
      %c0_31 = arith.constant 0 : index
      %28 = vector.load %arg8[%c0_30, %c0_31] : memref<27x147xf32, #tpu.memory_space<vmem>>, vector<27x147xf32>
      %29 = vector.extract_strided_slice %28 {offsets = [5, 125], sizes = [22, 22], strides = [1, 1]} : vector<27x147xf32> to vector<22x22xf32>
      %30 = vector.extract_strided_slice %27 {offsets = [0, 0], sizes = [16, 22], strides = [1, 1]} : vector<22x22xf32> to vector<16x22xf32>
      %31 = vector.extract_strided_slice %27 {offsets = [1, 0], sizes = [16, 22], strides = [1, 1]} : vector<22x22xf32> to vector<16x22xf32>
      %32 = vector.extract_strided_slice %27 {offsets = [2, 0], sizes = [16, 22], strides = [1, 1]} : vector<22x22xf32> to vector<16x22xf32>
      %33 = vector.extract_strided_slice %27 {offsets = [3, 0], sizes = [16, 22], strides = [1, 1]} : vector<22x22xf32> to vector<16x22xf32>
      %34 = vector.extract_strided_slice %27 {offsets = [4, 0], sizes = [16, 22], strides = [1, 1]} : vector<22x22xf32> to vector<16x22xf32>
      %35 = vector.extract_strided_slice %27 {offsets = [5, 0], sizes = [16, 22], strides = [1, 1]} : vector<22x22xf32> to vector<16x22xf32>
      %36 = vector.extract_strided_slice %27 {offsets = [6, 0], sizes = [16, 22], strides = [1, 1]} : vector<22x22xf32> to vector<16x22xf32>
      %37 = vector.extract_strided_slice %29 {offsets = [0, 0], sizes = [16, 22], strides = [1, 1]} : vector<22x22xf32> to vector<16x22xf32>
      %38 = vector.extract_strided_slice %29 {offsets = [1, 0], sizes = [16, 22], strides = [1, 1]} : vector<22x22xf32> to vector<16x22xf32>
      %39 = vector.extract_strided_slice %29 {offsets = [2, 0], sizes = [16, 22], strides = [1, 1]} : vector<22x22xf32> to vector<16x22xf32>
      %40 = vector.extract_strided_slice %29 {offsets = [3, 0], sizes = [16, 22], strides = [1, 1]} : vector<22x22xf32> to vector<16x22xf32>
      %41 = vector.extract_strided_slice %29 {offsets = [4, 0], sizes = [16, 22], strides = [1, 1]} : vector<22x22xf32> to vector<16x22xf32>
      %42 = vector.extract_strided_slice %29 {offsets = [5, 0], sizes = [16, 22], strides = [1, 1]} : vector<22x22xf32> to vector<16x22xf32>
      %43 = vector.extract_strided_slice %29 {offsets = [6, 0], sizes = [16, 22], strides = [1, 1]} : vector<22x22xf32> to vector<16x22xf32>
      %c0_32 = arith.constant 0 : index
      %44 = memref.load %arg2[%c0_32] : memref<99xf32, #tpu.memory_space<smem>>
      %45 = vector.broadcast %44 : f32 to vector<16x22xf32>
      %46 = arith.mulf %45, %30 : vector<16x22xf32>
      %c49 = arith.constant 49 : index
      %47 = memref.load %arg2[%c49] : memref<99xf32, #tpu.memory_space<smem>>
      %48 = vector.broadcast %47 : f32 to vector<16x22xf32>
      %49 = arith.mulf %48, %37 : vector<16x22xf32>
      %50 = arith.addf %46, %49 : vector<16x22xf32>
      %c7 = arith.constant 7 : index
      %51 = memref.load %arg2[%c7] : memref<99xf32, #tpu.memory_space<smem>>
      %52 = vector.broadcast %51 : f32 to vector<16x22xf32>
      %53 = arith.mulf %52, %31 : vector<16x22xf32>
      %54 = arith.addf %50, %53 : vector<16x22xf32>
      %c56 = arith.constant 56 : index
      %55 = memref.load %arg2[%c56] : memref<99xf32, #tpu.memory_space<smem>>
      %56 = vector.broadcast %55 : f32 to vector<16x22xf32>
      %57 = arith.mulf %56, %38 : vector<16x22xf32>
      %58 = arith.addf %54, %57 : vector<16x22xf32>
      %c14 = arith.constant 14 : index
      %59 = memref.load %arg2[%c14] : memref<99xf32, #tpu.memory_space<smem>>
      %60 = vector.broadcast %59 : f32 to vector<16x22xf32>
      %61 = arith.mulf %60, %32 : vector<16x22xf32>
      %62 = arith.addf %58, %61 : vector<16x22xf32>
      %c63 = arith.constant 63 : index
      %63 = memref.load %arg2[%c63] : memref<99xf32, #tpu.memory_space<smem>>
      %64 = vector.broadcast %63 : f32 to vector<16x22xf32>
      %65 = arith.mulf %64, %39 : vector<16x22xf32>
      %66 = arith.addf %62, %65 : vector<16x22xf32>
      %c21 = arith.constant 21 : index
      %67 = memref.load %arg2[%c21] : memref<99xf32, #tpu.memory_space<smem>>
      %68 = vector.broadcast %67 : f32 to vector<16x22xf32>
      %69 = arith.mulf %68, %33 : vector<16x22xf32>
      %70 = arith.addf %66, %69 : vector<16x22xf32>
      %c70 = arith.constant 70 : index
      %71 = memref.load %arg2[%c70] : memref<99xf32, #tpu.memory_space<smem>>
      %72 = vector.broadcast %71 : f32 to vector<16x22xf32>
      %73 = arith.mulf %72, %40 : vector<16x22xf32>
      %74 = arith.addf %70, %73 : vector<16x22xf32>
      %c28 = arith.constant 28 : index
      %75 = memref.load %arg2[%c28] : memref<99xf32, #tpu.memory_space<smem>>
      %76 = vector.broadcast %75 : f32 to vector<16x22xf32>
      %77 = arith.mulf %76, %34 : vector<16x22xf32>
      %78 = arith.addf %74, %77 : vector<16x22xf32>
      %c77 = arith.constant 77 : index
      %79 = memref.load %arg2[%c77] : memref<99xf32, #tpu.memory_space<smem>>
      %80 = vector.broadcast %79 : f32 to vector<16x22xf32>
      %81 = arith.mulf %80, %41 : vector<16x22xf32>
      %82 = arith.addf %78, %81 : vector<16x22xf32>
      %c35 = arith.constant 35 : index
      %83 = memref.load %arg2[%c35] : memref<99xf32, #tpu.memory_space<smem>>
      %84 = vector.broadcast %83 : f32 to vector<16x22xf32>
      %85 = arith.mulf %84, %35 : vector<16x22xf32>
      %86 = arith.addf %82, %85 : vector<16x22xf32>
      %c84 = arith.constant 84 : index
      %87 = memref.load %arg2[%c84] : memref<99xf32, #tpu.memory_space<smem>>
      %88 = vector.broadcast %87 : f32 to vector<16x22xf32>
      %89 = arith.mulf %88, %42 : vector<16x22xf32>
      %90 = arith.addf %86, %89 : vector<16x22xf32>
      %c42 = arith.constant 42 : index
      %91 = memref.load %arg2[%c42] : memref<99xf32, #tpu.memory_space<smem>>
      %92 = vector.broadcast %91 : f32 to vector<16x22xf32>
      %93 = arith.mulf %92, %36 : vector<16x22xf32>
      %94 = arith.addf %90, %93 : vector<16x22xf32>
      %c91 = arith.constant 91 : index
      %95 = memref.load %arg2[%c91] : memref<99xf32, #tpu.memory_space<smem>>
      %96 = vector.broadcast %95 : f32 to vector<16x22xf32>
      %97 = arith.mulf %96, %43 : vector<16x22xf32>
      %98 = arith.addf %94, %97 : vector<16x22xf32>
      %c1 = arith.constant 1 : index
      %99 = memref.load %arg2[%c1] : memref<99xf32, #tpu.memory_space<smem>>
      %100 = vector.broadcast %99 : f32 to vector<16x22xf32>
      %101 = arith.mulf %100, %30 : vector<16x22xf32>
      %c50 = arith.constant 50 : index
      %102 = memref.load %arg2[%c50] : memref<99xf32, #tpu.memory_space<smem>>
      %103 = vector.broadcast %102 : f32 to vector<16x22xf32>
      %104 = arith.mulf %103, %37 : vector<16x22xf32>
      %105 = arith.addf %101, %104 : vector<16x22xf32>
      %c8_33 = arith.constant 8 : index
      %106 = memref.load %arg2[%c8_33] : memref<99xf32, #tpu.memory_space<smem>>
      %107 = vector.broadcast %106 : f32 to vector<16x22xf32>
      %108 = arith.mulf %107, %31 : vector<16x22xf32>
      %109 = arith.addf %105, %108 : vector<16x22xf32>
      %c57 = arith.constant 57 : index
      %110 = memref.load %arg2[%c57] : memref<99xf32, #tpu.memory_space<smem>>
      %111 = vector.broadcast %110 : f32 to vector<16x22xf32>
      %112 = arith.mulf %111, %38 : vector<16x22xf32>
      %113 = arith.addf %109, %112 : vector<16x22xf32>
      %c15 = arith.constant 15 : index
      %114 = memref.load %arg2[%c15] : memref<99xf32, #tpu.memory_space<smem>>
      %115 = vector.broadcast %114 : f32 to vector<16x22xf32>
      %116 = arith.mulf %115, %32 : vector<16x22xf32>
      %117 = arith.addf %113, %116 : vector<16x22xf32>
      %c64 = arith.constant 64 : index
      %118 = memref.load %arg2[%c64] : memref<99xf32, #tpu.memory_space<smem>>
      %119 = vector.broadcast %118 : f32 to vector<16x22xf32>
      %120 = arith.mulf %119, %39 : vector<16x22xf32>
      %121 = arith.addf %117, %120 : vector<16x22xf32>
      %c22 = arith.constant 22 : index
      %122 = memref.load %arg2[%c22] : memref<99xf32, #tpu.memory_space<smem>>
      %123 = vector.broadcast %122 : f32 to vector<16x22xf32>
      %124 = arith.mulf %123, %33 : vector<16x22xf32>
      %125 = arith.addf %121, %124 : vector<16x22xf32>
      %c71 = arith.constant 71 : index
      %126 = memref.load %arg2[%c71] : memref<99xf32, #tpu.memory_space<smem>>
      %127 = vector.broadcast %126 : f32 to vector<16x22xf32>
      %128 = arith.mulf %127, %40 : vector<16x22xf32>
      %129 = arith.addf %125, %128 : vector<16x22xf32>
      %c29 = arith.constant 29 : index
      %130 = memref.load %arg2[%c29] : memref<99xf32, #tpu.memory_space<smem>>
      %131 = vector.broadcast %130 : f32 to vector<16x22xf32>
      %132 = arith.mulf %131, %34 : vector<16x22xf32>
      %133 = arith.addf %129, %132 : vector<16x22xf32>
      %c78 = arith.constant 78 : index
      %134 = memref.load %arg2[%c78] : memref<99xf32, #tpu.memory_space<smem>>
      %135 = vector.broadcast %134 : f32 to vector<16x22xf32>
      %136 = arith.mulf %135, %41 : vector<16x22xf32>
      %137 = arith.addf %133, %136 : vector<16x22xf32>
      %c36 = arith.constant 36 : index
      %138 = memref.load %arg2[%c36] : memref<99xf32, #tpu.memory_space<smem>>
      %139 = vector.broadcast %138 : f32 to vector<16x22xf32>
      %140 = arith.mulf %139, %35 : vector<16x22xf32>
      %141 = arith.addf %137, %140 : vector<16x22xf32>
      %c85 = arith.constant 85 : index
      %142 = memref.load %arg2[%c85] : memref<99xf32, #tpu.memory_space<smem>>
      %143 = vector.broadcast %142 : f32 to vector<16x22xf32>
      %144 = arith.mulf %143, %42 : vector<16x22xf32>
      %145 = arith.addf %141, %144 : vector<16x22xf32>
      %c43 = arith.constant 43 : index
      %146 = memref.load %arg2[%c43] : memref<99xf32, #tpu.memory_space<smem>>
      %147 = vector.broadcast %146 : f32 to vector<16x22xf32>
      %148 = arith.mulf %147, %36 : vector<16x22xf32>
      %149 = arith.addf %145, %148 : vector<16x22xf32>
      %c92 = arith.constant 92 : index
      %150 = memref.load %arg2[%c92] : memref<99xf32, #tpu.memory_space<smem>>
      %151 = vector.broadcast %150 : f32 to vector<16x22xf32>
      %152 = arith.mulf %151, %43 : vector<16x22xf32>
      %153 = arith.addf %149, %152 : vector<16x22xf32>
      %c2 = arith.constant 2 : index
      %154 = memref.load %arg2[%c2] : memref<99xf32, #tpu.memory_space<smem>>
      %155 = vector.broadcast %154 : f32 to vector<16x22xf32>
      %156 = arith.mulf %155, %30 : vector<16x22xf32>
      %c51 = arith.constant 51 : index
      %157 = memref.load %arg2[%c51] : memref<99xf32, #tpu.memory_space<smem>>
      %158 = vector.broadcast %157 : f32 to vector<16x22xf32>
      %159 = arith.mulf %158, %37 : vector<16x22xf32>
      %160 = arith.addf %156, %159 : vector<16x22xf32>
      %c9 = arith.constant 9 : index
      %161 = memref.load %arg2[%c9] : memref<99xf32, #tpu.memory_space<smem>>
      %162 = vector.broadcast %161 : f32 to vector<16x22xf32>
      %163 = arith.mulf %162, %31 : vector<16x22xf32>
      %164 = arith.addf %160, %163 : vector<16x22xf32>
      %c58 = arith.constant 58 : index
      %165 = memref.load %arg2[%c58] : memref<99xf32, #tpu.memory_space<smem>>
      %166 = vector.broadcast %165 : f32 to vector<16x22xf32>
      %167 = arith.mulf %166, %38 : vector<16x22xf32>
      %168 = arith.addf %164, %167 : vector<16x22xf32>
      %c16 = arith.constant 16 : index
      %169 = memref.load %arg2[%c16] : memref<99xf32, #tpu.memory_space<smem>>
      %170 = vector.broadcast %169 : f32 to vector<16x22xf32>
      %171 = arith.mulf %170, %32 : vector<16x22xf32>
      %172 = arith.addf %168, %171 : vector<16x22xf32>
      %c65 = arith.constant 65 : index
      %173 = memref.load %arg2[%c65] : memref<99xf32, #tpu.memory_space<smem>>
      %174 = vector.broadcast %173 : f32 to vector<16x22xf32>
      %175 = arith.mulf %174, %39 : vector<16x22xf32>
      %176 = arith.addf %172, %175 : vector<16x22xf32>
      %c23 = arith.constant 23 : index
      %177 = memref.load %arg2[%c23] : memref<99xf32, #tpu.memory_space<smem>>
      %178 = vector.broadcast %177 : f32 to vector<16x22xf32>
      %179 = arith.mulf %178, %33 : vector<16x22xf32>
      %180 = arith.addf %176, %179 : vector<16x22xf32>
      %c72 = arith.constant 72 : index
      %181 = memref.load %arg2[%c72] : memref<99xf32, #tpu.memory_space<smem>>
      %182 = vector.broadcast %181 : f32 to vector<16x22xf32>
      %183 = arith.mulf %182, %40 : vector<16x22xf32>
      %184 = arith.addf %180, %183 : vector<16x22xf32>
      %c30 = arith.constant 30 : index
      %185 = memref.load %arg2[%c30] : memref<99xf32, #tpu.memory_space<smem>>
      %186 = vector.broadcast %185 : f32 to vector<16x22xf32>
      %187 = arith.mulf %186, %34 : vector<16x22xf32>
      %188 = arith.addf %184, %187 : vector<16x22xf32>
      %c79 = arith.constant 79 : index
      %189 = memref.load %arg2[%c79] : memref<99xf32, #tpu.memory_space<smem>>
      %190 = vector.broadcast %189 : f32 to vector<16x22xf32>
      %191 = arith.mulf %190, %41 : vector<16x22xf32>
      %192 = arith.addf %188, %191 : vector<16x22xf32>
      %c37 = arith.constant 37 : index
      %193 = memref.load %arg2[%c37] : memref<99xf32, #tpu.memory_space<smem>>
      %194 = vector.broadcast %193 : f32 to vector<16x22xf32>
      %195 = arith.mulf %194, %35 : vector<16x22xf32>
      %196 = arith.addf %192, %195 : vector<16x22xf32>
      %c86 = arith.constant 86 : index
      %197 = memref.load %arg2[%c86] : memref<99xf32, #tpu.memory_space<smem>>
      %198 = vector.broadcast %197 : f32 to vector<16x22xf32>
      %199 = arith.mulf %198, %42 : vector<16x22xf32>
      %200 = arith.addf %196, %199 : vector<16x22xf32>
      %c44 = arith.constant 44 : index
      %201 = memref.load %arg2[%c44] : memref<99xf32, #tpu.memory_space<smem>>
      %202 = vector.broadcast %201 : f32 to vector<16x22xf32>
      %203 = arith.mulf %202, %36 : vector<16x22xf32>
      %204 = arith.addf %200, %203 : vector<16x22xf32>
      %c93 = arith.constant 93 : index
      %205 = memref.load %arg2[%c93] : memref<99xf32, #tpu.memory_space<smem>>
      %206 = vector.broadcast %205 : f32 to vector<16x22xf32>
      %207 = arith.mulf %206, %43 : vector<16x22xf32>
      %208 = arith.addf %204, %207 : vector<16x22xf32>
      %c3 = arith.constant 3 : index
      %209 = memref.load %arg2[%c3] : memref<99xf32, #tpu.memory_space<smem>>
      %210 = vector.broadcast %209 : f32 to vector<16x22xf32>
      %211 = arith.mulf %210, %30 : vector<16x22xf32>
      %c52 = arith.constant 52 : index
      %212 = memref.load %arg2[%c52] : memref<99xf32, #tpu.memory_space<smem>>
      %213 = vector.broadcast %212 : f32 to vector<16x22xf32>
      %214 = arith.mulf %213, %37 : vector<16x22xf32>
      %215 = arith.addf %211, %214 : vector<16x22xf32>
      %c10 = arith.constant 10 : index
      %216 = memref.load %arg2[%c10] : memref<99xf32, #tpu.memory_space<smem>>
      %217 = vector.broadcast %216 : f32 to vector<16x22xf32>
      %218 = arith.mulf %217, %31 : vector<16x22xf32>
      %219 = arith.addf %215, %218 : vector<16x22xf32>
      %c59 = arith.constant 59 : index
      %220 = memref.load %arg2[%c59] : memref<99xf32, #tpu.memory_space<smem>>
      %221 = vector.broadcast %220 : f32 to vector<16x22xf32>
      %222 = arith.mulf %221, %38 : vector<16x22xf32>
      %223 = arith.addf %219, %222 : vector<16x22xf32>
      %c17 = arith.constant 17 : index
      %224 = memref.load %arg2[%c17] : memref<99xf32, #tpu.memory_space<smem>>
      %225 = vector.broadcast %224 : f32 to vector<16x22xf32>
      %226 = arith.mulf %225, %32 : vector<16x22xf32>
      %227 = arith.addf %223, %226 : vector<16x22xf32>
      %c66 = arith.constant 66 : index
      %228 = memref.load %arg2[%c66] : memref<99xf32, #tpu.memory_space<smem>>
      %229 = vector.broadcast %228 : f32 to vector<16x22xf32>
      %230 = arith.mulf %229, %39 : vector<16x22xf32>
      %231 = arith.addf %227, %230 : vector<16x22xf32>
      %c24 = arith.constant 24 : index
      %232 = memref.load %arg2[%c24] : memref<99xf32, #tpu.memory_space<smem>>
      %233 = vector.broadcast %232 : f32 to vector<16x22xf32>
      %234 = arith.mulf %233, %33 : vector<16x22xf32>
      %235 = arith.addf %231, %234 : vector<16x22xf32>
      %c73 = arith.constant 73 : index
      %236 = memref.load %arg2[%c73] : memref<99xf32, #tpu.memory_space<smem>>
      %237 = vector.broadcast %236 : f32 to vector<16x22xf32>
      %238 = arith.mulf %237, %40 : vector<16x22xf32>
      %239 = arith.addf %235, %238 : vector<16x22xf32>
      %c31 = arith.constant 31 : index
      %240 = memref.load %arg2[%c31] : memref<99xf32, #tpu.memory_space<smem>>
      %241 = vector.broadcast %240 : f32 to vector<16x22xf32>
      %242 = arith.mulf %241, %34 : vector<16x22xf32>
      %243 = arith.addf %239, %242 : vector<16x22xf32>
      %c80 = arith.constant 80 : index
      %244 = memref.load %arg2[%c80] : memref<99xf32, #tpu.memory_space<smem>>
      %245 = vector.broadcast %244 : f32 to vector<16x22xf32>
      %246 = arith.mulf %245, %41 : vector<16x22xf32>
      %247 = arith.addf %243, %246 : vector<16x22xf32>
      %c38 = arith.constant 38 : index
      %248 = memref.load %arg2[%c38] : memref<99xf32, #tpu.memory_space<smem>>
      %249 = vector.broadcast %248 : f32 to vector<16x22xf32>
      %250 = arith.mulf %249, %35 : vector<16x22xf32>
      %251 = arith.addf %247, %250 : vector<16x22xf32>
      %c87 = arith.constant 87 : index
      %252 = memref.load %arg2[%c87] : memref<99xf32, #tpu.memory_space<smem>>
      %253 = vector.broadcast %252 : f32 to vector<16x22xf32>
      %254 = arith.mulf %253, %42 : vector<16x22xf32>
      %255 = arith.addf %251, %254 : vector<16x22xf32>
      %c45 = arith.constant 45 : index
      %256 = memref.load %arg2[%c45] : memref<99xf32, #tpu.memory_space<smem>>
      %257 = vector.broadcast %256 : f32 to vector<16x22xf32>
      %258 = arith.mulf %257, %36 : vector<16x22xf32>
      %259 = arith.addf %255, %258 : vector<16x22xf32>
      %c94 = arith.constant 94 : index
      %260 = memref.load %arg2[%c94] : memref<99xf32, #tpu.memory_space<smem>>
      %261 = vector.broadcast %260 : f32 to vector<16x22xf32>
      %262 = arith.mulf %261, %43 : vector<16x22xf32>
      %263 = arith.addf %259, %262 : vector<16x22xf32>
      %c4 = arith.constant 4 : index
      %264 = memref.load %arg2[%c4] : memref<99xf32, #tpu.memory_space<smem>>
      %265 = vector.broadcast %264 : f32 to vector<16x22xf32>
      %266 = arith.mulf %265, %30 : vector<16x22xf32>
      %c53 = arith.constant 53 : index
      %267 = memref.load %arg2[%c53] : memref<99xf32, #tpu.memory_space<smem>>
      %268 = vector.broadcast %267 : f32 to vector<16x22xf32>
      %269 = arith.mulf %268, %37 : vector<16x22xf32>
      %270 = arith.addf %266, %269 : vector<16x22xf32>
      %c11 = arith.constant 11 : index
      %271 = memref.load %arg2[%c11] : memref<99xf32, #tpu.memory_space<smem>>
      %272 = vector.broadcast %271 : f32 to vector<16x22xf32>
      %273 = arith.mulf %272, %31 : vector<16x22xf32>
      %274 = arith.addf %270, %273 : vector<16x22xf32>
      %c60 = arith.constant 60 : index
      %275 = memref.load %arg2[%c60] : memref<99xf32, #tpu.memory_space<smem>>
      %276 = vector.broadcast %275 : f32 to vector<16x22xf32>
      %277 = arith.mulf %276, %38 : vector<16x22xf32>
      %278 = arith.addf %274, %277 : vector<16x22xf32>
      %c18 = arith.constant 18 : index
      %279 = memref.load %arg2[%c18] : memref<99xf32, #tpu.memory_space<smem>>
      %280 = vector.broadcast %279 : f32 to vector<16x22xf32>
      %281 = arith.mulf %280, %32 : vector<16x22xf32>
      %282 = arith.addf %278, %281 : vector<16x22xf32>
      %c67 = arith.constant 67 : index
      %283 = memref.load %arg2[%c67] : memref<99xf32, #tpu.memory_space<smem>>
      %284 = vector.broadcast %283 : f32 to vector<16x22xf32>
      %285 = arith.mulf %284, %39 : vector<16x22xf32>
      %286 = arith.addf %282, %285 : vector<16x22xf32>
      %c25 = arith.constant 25 : index
      %287 = memref.load %arg2[%c25] : memref<99xf32, #tpu.memory_space<smem>>
      %288 = vector.broadcast %287 : f32 to vector<16x22xf32>
      %289 = arith.mulf %288, %33 : vector<16x22xf32>
      %290 = arith.addf %286, %289 : vector<16x22xf32>
      %c74 = arith.constant 74 : index
      %291 = memref.load %arg2[%c74] : memref<99xf32, #tpu.memory_space<smem>>
      %292 = vector.broadcast %291 : f32 to vector<16x22xf32>
      %293 = arith.mulf %292, %40 : vector<16x22xf32>
      %294 = arith.addf %290, %293 : vector<16x22xf32>
      %c32 = arith.constant 32 : index
      %295 = memref.load %arg2[%c32] : memref<99xf32, #tpu.memory_space<smem>>
      %296 = vector.broadcast %295 : f32 to vector<16x22xf32>
      %297 = arith.mulf %296, %34 : vector<16x22xf32>
      %298 = arith.addf %294, %297 : vector<16x22xf32>
      %c81 = arith.constant 81 : index
      %299 = memref.load %arg2[%c81] : memref<99xf32, #tpu.memory_space<smem>>
      %300 = vector.broadcast %299 : f32 to vector<16x22xf32>
      %301 = arith.mulf %300, %41 : vector<16x22xf32>
      %302 = arith.addf %298, %301 : vector<16x22xf32>
      %c39 = arith.constant 39 : index
      %303 = memref.load %arg2[%c39] : memref<99xf32, #tpu.memory_space<smem>>
      %304 = vector.broadcast %303 : f32 to vector<16x22xf32>
      %305 = arith.mulf %304, %35 : vector<16x22xf32>
      %306 = arith.addf %302, %305 : vector<16x22xf32>
      %c88 = arith.constant 88 : index
      %307 = memref.load %arg2[%c88] : memref<99xf32, #tpu.memory_space<smem>>
      %308 = vector.broadcast %307 : f32 to vector<16x22xf32>
      %309 = arith.mulf %308, %42 : vector<16x22xf32>
      %310 = arith.addf %306, %309 : vector<16x22xf32>
      %c46 = arith.constant 46 : index
      %311 = memref.load %arg2[%c46] : memref<99xf32, #tpu.memory_space<smem>>
      %312 = vector.broadcast %311 : f32 to vector<16x22xf32>
      %313 = arith.mulf %312, %36 : vector<16x22xf32>
      %314 = arith.addf %310, %313 : vector<16x22xf32>
      %c95 = arith.constant 95 : index
      %315 = memref.load %arg2[%c95] : memref<99xf32, #tpu.memory_space<smem>>
      %316 = vector.broadcast %315 : f32 to vector<16x22xf32>
      %317 = arith.mulf %316, %43 : vector<16x22xf32>
      %318 = arith.addf %314, %317 : vector<16x22xf32>
      %c5 = arith.constant 5 : index
      %319 = memref.load %arg2[%c5] : memref<99xf32, #tpu.memory_space<smem>>
      %320 = vector.broadcast %319 : f32 to vector<16x22xf32>
      %321 = arith.mulf %320, %30 : vector<16x22xf32>
      %c54 = arith.constant 54 : index
      %322 = memref.load %arg2[%c54] : memref<99xf32, #tpu.memory_space<smem>>
      %323 = vector.broadcast %322 : f32 to vector<16x22xf32>
      %324 = arith.mulf %323, %37 : vector<16x22xf32>
      %325 = arith.addf %321, %324 : vector<16x22xf32>
      %c12 = arith.constant 12 : index
      %326 = memref.load %arg2[%c12] : memref<99xf32, #tpu.memory_space<smem>>
      %327 = vector.broadcast %326 : f32 to vector<16x22xf32>
      %328 = arith.mulf %327, %31 : vector<16x22xf32>
      %329 = arith.addf %325, %328 : vector<16x22xf32>
      %c61 = arith.constant 61 : index
      %330 = memref.load %arg2[%c61] : memref<99xf32, #tpu.memory_space<smem>>
      %331 = vector.broadcast %330 : f32 to vector<16x22xf32>
      %332 = arith.mulf %331, %38 : vector<16x22xf32>
      %333 = arith.addf %329, %332 : vector<16x22xf32>
      %c19 = arith.constant 19 : index
      %334 = memref.load %arg2[%c19] : memref<99xf32, #tpu.memory_space<smem>>
      %335 = vector.broadcast %334 : f32 to vector<16x22xf32>
      %336 = arith.mulf %335, %32 : vector<16x22xf32>
      %337 = arith.addf %333, %336 : vector<16x22xf32>
      %c68 = arith.constant 68 : index
      %338 = memref.load %arg2[%c68] : memref<99xf32, #tpu.memory_space<smem>>
      %339 = vector.broadcast %338 : f32 to vector<16x22xf32>
      %340 = arith.mulf %339, %39 : vector<16x22xf32>
      %341 = arith.addf %337, %340 : vector<16x22xf32>
      %c26 = arith.constant 26 : index
      %342 = memref.load %arg2[%c26] : memref<99xf32, #tpu.memory_space<smem>>
      %343 = vector.broadcast %342 : f32 to vector<16x22xf32>
      %344 = arith.mulf %343, %33 : vector<16x22xf32>
      %345 = arith.addf %341, %344 : vector<16x22xf32>
      %c75 = arith.constant 75 : index
      %346 = memref.load %arg2[%c75] : memref<99xf32, #tpu.memory_space<smem>>
      %347 = vector.broadcast %346 : f32 to vector<16x22xf32>
      %348 = arith.mulf %347, %40 : vector<16x22xf32>
      %349 = arith.addf %345, %348 : vector<16x22xf32>
      %c33 = arith.constant 33 : index
      %350 = memref.load %arg2[%c33] : memref<99xf32, #tpu.memory_space<smem>>
      %351 = vector.broadcast %350 : f32 to vector<16x22xf32>
      %352 = arith.mulf %351, %34 : vector<16x22xf32>
      %353 = arith.addf %349, %352 : vector<16x22xf32>
      %c82 = arith.constant 82 : index
      %354 = memref.load %arg2[%c82] : memref<99xf32, #tpu.memory_space<smem>>
      %355 = vector.broadcast %354 : f32 to vector<16x22xf32>
      %356 = arith.mulf %355, %41 : vector<16x22xf32>
      %357 = arith.addf %353, %356 : vector<16x22xf32>
      %c40 = arith.constant 40 : index
      %358 = memref.load %arg2[%c40] : memref<99xf32, #tpu.memory_space<smem>>
      %359 = vector.broadcast %358 : f32 to vector<16x22xf32>
      %360 = arith.mulf %359, %35 : vector<16x22xf32>
      %361 = arith.addf %357, %360 : vector<16x22xf32>
      %c89 = arith.constant 89 : index
      %362 = memref.load %arg2[%c89] : memref<99xf32, #tpu.memory_space<smem>>
      %363 = vector.broadcast %362 : f32 to vector<16x22xf32>
      %364 = arith.mulf %363, %42 : vector<16x22xf32>
      %365 = arith.addf %361, %364 : vector<16x22xf32>
      %c47 = arith.constant 47 : index
      %366 = memref.load %arg2[%c47] : memref<99xf32, #tpu.memory_space<smem>>
      %367 = vector.broadcast %366 : f32 to vector<16x22xf32>
      %368 = arith.mulf %367, %36 : vector<16x22xf32>
      %369 = arith.addf %365, %368 : vector<16x22xf32>
      %c96 = arith.constant 96 : index
      %370 = memref.load %arg2[%c96] : memref<99xf32, #tpu.memory_space<smem>>
      %371 = vector.broadcast %370 : f32 to vector<16x22xf32>
      %372 = arith.mulf %371, %43 : vector<16x22xf32>
      %373 = arith.addf %369, %372 : vector<16x22xf32>
      %c6 = arith.constant 6 : index
      %374 = memref.load %arg2[%c6] : memref<99xf32, #tpu.memory_space<smem>>
      %375 = vector.broadcast %374 : f32 to vector<16x22xf32>
      %376 = arith.mulf %375, %30 : vector<16x22xf32>
      %c55 = arith.constant 55 : index
      %377 = memref.load %arg2[%c55] : memref<99xf32, #tpu.memory_space<smem>>
      %378 = vector.broadcast %377 : f32 to vector<16x22xf32>
      %379 = arith.mulf %378, %37 : vector<16x22xf32>
      %380 = arith.addf %376, %379 : vector<16x22xf32>
      %c13 = arith.constant 13 : index
      %381 = memref.load %arg2[%c13] : memref<99xf32, #tpu.memory_space<smem>>
      %382 = vector.broadcast %381 : f32 to vector<16x22xf32>
      %383 = arith.mulf %382, %31 : vector<16x22xf32>
      %384 = arith.addf %380, %383 : vector<16x22xf32>
      %c62 = arith.constant 62 : index
      %385 = memref.load %arg2[%c62] : memref<99xf32, #tpu.memory_space<smem>>
      %386 = vector.broadcast %385 : f32 to vector<16x22xf32>
      %387 = arith.mulf %386, %38 : vector<16x22xf32>
      %388 = arith.addf %384, %387 : vector<16x22xf32>
      %c20 = arith.constant 20 : index
      %389 = memref.load %arg2[%c20] : memref<99xf32, #tpu.memory_space<smem>>
      %390 = vector.broadcast %389 : f32 to vector<16x22xf32>
      %391 = arith.mulf %390, %32 : vector<16x22xf32>
      %392 = arith.addf %388, %391 : vector<16x22xf32>
      %c69 = arith.constant 69 : index
      %393 = memref.load %arg2[%c69] : memref<99xf32, #tpu.memory_space<smem>>
      %394 = vector.broadcast %393 : f32 to vector<16x22xf32>
      %395 = arith.mulf %394, %39 : vector<16x22xf32>
      %396 = arith.addf %392, %395 : vector<16x22xf32>
      %c27 = arith.constant 27 : index
      %397 = memref.load %arg2[%c27] : memref<99xf32, #tpu.memory_space<smem>>
      %398 = vector.broadcast %397 : f32 to vector<16x22xf32>
      %399 = arith.mulf %398, %33 : vector<16x22xf32>
      %400 = arith.addf %396, %399 : vector<16x22xf32>
      %c76 = arith.constant 76 : index
      %401 = memref.load %arg2[%c76] : memref<99xf32, #tpu.memory_space<smem>>
      %402 = vector.broadcast %401 : f32 to vector<16x22xf32>
      %403 = arith.mulf %402, %40 : vector<16x22xf32>
      %404 = arith.addf %400, %403 : vector<16x22xf32>
      %c34 = arith.constant 34 : index
      %405 = memref.load %arg2[%c34] : memref<99xf32, #tpu.memory_space<smem>>
      %406 = vector.broadcast %405 : f32 to vector<16x22xf32>
      %407 = arith.mulf %406, %34 : vector<16x22xf32>
      %408 = arith.addf %404, %407 : vector<16x22xf32>
      %c83 = arith.constant 83 : index
      %409 = memref.load %arg2[%c83] : memref<99xf32, #tpu.memory_space<smem>>
      %410 = vector.broadcast %409 : f32 to vector<16x22xf32>
      %411 = arith.mulf %410, %41 : vector<16x22xf32>
      %412 = arith.addf %408, %411 : vector<16x22xf32>
      %c41 = arith.constant 41 : index
      %413 = memref.load %arg2[%c41] : memref<99xf32, #tpu.memory_space<smem>>
      %414 = vector.broadcast %413 : f32 to vector<16x22xf32>
      %415 = arith.mulf %414, %35 : vector<16x22xf32>
      %416 = arith.addf %412, %415 : vector<16x22xf32>
      %c90 = arith.constant 90 : index
      %417 = memref.load %arg2[%c90] : memref<99xf32, #tpu.memory_space<smem>>
      %418 = vector.broadcast %417 : f32 to vector<16x22xf32>
      %419 = arith.mulf %418, %42 : vector<16x22xf32>
      %420 = arith.addf %416, %419 : vector<16x22xf32>
      %c48 = arith.constant 48 : index
      %421 = memref.load %arg2[%c48] : memref<99xf32, #tpu.memory_space<smem>>
      %422 = vector.broadcast %421 : f32 to vector<16x22xf32>
      %423 = arith.mulf %422, %36 : vector<16x22xf32>
      %424 = arith.addf %420, %423 : vector<16x22xf32>
      %c97 = arith.constant 97 : index
      %425 = memref.load %arg2[%c97] : memref<99xf32, #tpu.memory_space<smem>>
      %426 = vector.broadcast %425 : f32 to vector<16x22xf32>
      %427 = arith.mulf %426, %43 : vector<16x22xf32>
      %428 = arith.addf %424, %427 : vector<16x22xf32>
      %c98 = arith.constant 98 : index
      %429 = memref.load %arg2[%c98] : memref<99xf32, #tpu.memory_space<smem>>
      %430 = vector.broadcast %429 : f32 to vector<16x16xf32>
      %431 = vector.extract_strided_slice %98 {offsets = [0, 0], sizes = [16, 16], strides = [1, 1]} : vector<16x22xf32> to vector<16x16xf32>
      %432 = arith.addf %430, %431 : vector<16x16xf32>
      %433 = vector.extract_strided_slice %153 {offsets = [0, 1], sizes = [16, 16], strides = [1, 1]} : vector<16x22xf32> to vector<16x16xf32>
      %434 = arith.addf %432, %433 : vector<16x16xf32>
      %435 = vector.extract_strided_slice %208 {offsets = [0, 2], sizes = [16, 16], strides = [1, 1]} : vector<16x22xf32> to vector<16x16xf32>
      %436 = arith.addf %434, %435 : vector<16x16xf32>
      %437 = vector.extract_strided_slice %263 {offsets = [0, 3], sizes = [16, 16], strides = [1, 1]} : vector<16x22xf32> to vector<16x16xf32>
      %438 = arith.addf %436, %437 : vector<16x16xf32>
      %439 = vector.extract_strided_slice %318 {offsets = [0, 4], sizes = [16, 16], strides = [1, 1]} : vector<16x22xf32> to vector<16x16xf32>
      %440 = arith.addf %438, %439 : vector<16x16xf32>
      %441 = vector.extract_strided_slice %373 {offsets = [0, 5], sizes = [16, 16], strides = [1, 1]} : vector<16x22xf32> to vector<16x16xf32>
      %442 = arith.addf %440, %441 : vector<16x16xf32>
      %443 = vector.extract_strided_slice %428 {offsets = [0, 6], sizes = [16, 16], strides = [1, 1]} : vector<16x22xf32> to vector<16x16xf32>
      %444 = arith.addf %442, %443 : vector<16x16xf32>
      %445 = arith.negf %444 : vector<16x16xf32>
      %446 = math.exp %445 : vector<16x16xf32>
      %cst_34 = arith.constant 1.000000e+00 : f32
      %447 = vector.broadcast %cst_34 : f32 to vector<16x16xf32>
      %448 = arith.addf %447, %446 : vector<16x16xf32>
      %449 = arith.divf %447, %448 : vector<16x16xf32>
      %c0_35 = arith.constant 0 : index
      %c0_36 = arith.constant 0 : index
      %c0_37 = arith.constant 0 : index
      %450 = vector.load %arg4[%c0_35, %c0_36, %c0_37] : memref<1x16x16xf32, #tpu.memory_space<vmem>>, vector<1x16x16xf32>
      %451 = vector.shape_cast %450 : vector<1x16x16xf32> to vector<16x16xf32>
      %452 = vector.shape_cast %449 : vector<16x16xf32> to vector<1x16x16xf32>
      tpu.vector_store %arg4[%c0_35, %c0_36, %c0_37], %452 {strides = array<i32>} : memref<1x16x16xf32, #tpu.memory_space<vmem>>, vector<1x16x16xf32>,
    } else {
    }
    return
  }
  func.func @transform_0(%arg0: i32, %arg1: i32) -> i32 {
    %c0_i32 = arith.constant 0 : i32
    %c0_i32_0 = arith.constant 0 : i32
    return %c0_i32 : i32
  }
  func.func @transform_1(%arg0: i32, %arg1: i32) -> (i32, i32, i32, i32) {
    %c0_i32 = arith.constant 0 : i32
    %c0_i32_0 = arith.constant 0 : i32
    %c0_i32_1 = arith.constant 0 : i32
    return %arg0, %arg1, %c0_i32, %c0_i32_0 : i32, i32, i32, i32
  }
  func.func @transform_2(%arg0: i32, %arg1: i32) -> (i32, i32, i32) {
    %c0_i32 = arith.constant 0 : i32
    %c0_i32_0 = arith.constant 0 : i32
    %c0_i32_1 = arith.constant 0 : i32
    return %arg0, %c0_i32, %c0_i32_0 : i32, i32, i32
  }
}

</mosaic_0001>

<llo_original>
// kernel: tpu_custom_call.1
$region0: #{tpu_custom_call.1}
  #allocation0 [shape = 'u32[]', space=smem, size = 0x4, offset = 0x4, fixed_abs, tag = 'smem constant byte address 0x4 - core index']
  #allocation1 [shape = 'u32[144,128]{1,0:T(1,128)}', space=vmem, size = 0x12000, scoped, tag = 'internal scratch']
  #allocation2 [shape = 'f32[16,16]{1,0:T(8,128)}', space=vmem, size = 0x2000, scoped, tag = 'scratch operand']
  #allocation3 [shape = 'f32[16,16]{1,0:T(8,128)}', space=vmem, size = 0x2000, scoped, tag = 'scratch operand']
  #allocation4 [shape = 'f32[27,147]{1,0:T(8,128)}', space=vmem, size = 0x8000, scoped, tag = 'scratch operand']
  #allocation5 [shape = 'f32[27,147]{1,0:T(8,128)}', space=vmem, size = 0x8000, scoped, tag = 'scratch operand']
  %s0 = inlined_call_operand.hbm [shape: f32[99], index: 0, kind: input, shape index: {}]
  %s1 = inlined_call_operand.hbm [shape: f32[2,4,16,16], index: 1, kind: input, shape index: {}]
  %s2 = inlined_call_operand.hbm [shape: f32[2,16,16], index: 2, kind: output, shape index: {}]
  %s3 = sld [smem:[#allocation0]]
  $region57: #{tpu_custom_call.1} parent=0
    _
  %s5 = ssub.s32 1, %s3
  %s6 = scalar_select 0, %s5, %s3
  $region1: #{tpu_custom_call.1} parent=0
    #allocation6 [shape = 'u8[512]{0}', space=smem, size = 0x200, scoped, tag = 'input window, operand 0, single buffered']
    #allocation7 [shape = 's32[2]{0}', space=sflag, size = 0x8, scoped, tag = 'scoped memory for tpu_custom_call.1']
    #allocation8 [shape = 's32[2]{0}', space=sflag, size = 0x8, scoped, tag = 'scoped memory for tpu_custom_call.1']
    #allocation9 [shape = 's32[2]{0}', space=sflag, size = 0x8, scoped, tag = 'scoped memory for tpu_custom_call.1']
    #allocation10 [shape = 'u8[65536]{0}', space=vmem, size = 0x10000, scoped, tag = 'input window, operand 1']
    #allocation11 [shape = 'u8[16384]{0}', space=vmem, size = 0x4000, scoped, tag = 'output window, operand 0']
    %7 = vsyncpa [#allocation9], 0
    %8 = vsyncpa [#allocation7], 0
    %s9 = scalar_lea.sflag [#allocation7], 1
    %10 = vsyncpa %s9, 0
    %11 = vsyncpa [#allocation8], 0
    %s12 = scalar_lea.sflag [#allocation8], 1
    %13 = vsyncpa %s12, 0
    loop: start=0, step=1, limit=4
    $region2: #{tpu_custom_call.1} parent=1 // loop_pre_header
      _
    $region3: #{tpu_custom_call.1} parent=1 // loop_header
      %s15 = sphi 0, %s19
      %p16 = scmp.ge.s32.totalorder %s15, 4
      %s22 = sphi 0, %s34
      %s23 = sphi 0, %s30
      %s24 = sphi 0, %s22
      %s25 = sphi 0, %s23
      %s26 = sphi 0, %s24
      %s27 = sphi 0, %s25
      %s35 = sphi 0, %s35
      %s37 = sphi 0, %s35
      %s38 = sphi 0, %s37
      %s52 = sphi 0, %s38
      %s60 = sphi 0, %s62
      %s63 = sphi 0, %s60
      %s64 = sphi 0, %s63
      %s80 = sphi 0, %s64
      %s86 = sphi 0, %s88
      %s89 = sphi 0, %s86
      %s90 = sphi 0, %s89
      %s106 = sphi 0, %s90
    $region4: #{tpu_custom_call.1} parent=1 // loop_header_branch
      %18 = sbr.rel (%p16) target = $region8
    $region5: #{tpu_custom_call.1} parent=1 // loop_body
      %s20 = ssub.s32 %s15, 1
      %s21 = ssub.s32 %s15, 2
      %s28 = sadd.s32 1, %s23
      %p29 = scmp.ge.s32.totalorder %s28, 1
      %s30 = scalar_select %p29, 0, %s28
      %s31 = sadd.s32 1, %s22
      %s32 = scalar_select %p29, %s31, %s22
      %p33 = scmp.ge.s32.totalorder %s32, 2
      %s34 = scalar_select %p33, 0, %s32
      %s36 = sadd.s32 %s35, 1
      %p39 = scmp.eq.s32.totalorder %s15, 1
      %p40 = scmp.ne.s32.totalorder %s35, %s37
      %p41 = scmp.eq.s32.totalorder %s15, 0
      %p42 = por %p40, %p41
      %p43 = scmp.ne.s32.totalorder %s35, %s37
      %p44 = scmp.eq.s32.totalorder %s20, 1
      %p45 = por %p43, %p44
      %p46 = scmp.ne.s32.totalorder %s37, %s38
      %p47 = scmp.eq.s32.totalorder %s20, 0
      %p48 = por %p46, %p47
      %p49 = scmp.ne.s32.totalorder %s37, %s38
      %p50 = scmp.eq.s32.totalorder %s21, 1
      %p51 = por %p49, %p50
      %p53 = scmp.ne.s32.totalorder %s38, %s52
      %p54 = scmp.eq.s32.totalorder %s21, 0
      %p55 = por %p53, %p54
      %s56 = ssub.s32 %s22, %s34
      %s57 = ssub.s32 %s23, %s30
      %s58 = sor.u32 %s56, %s57
      %p59 = scmp.eq.s32.totalorder %s58, 0
      %s61 = sadd.s32 %s60, 1
      %s62 = scalar_select %p59, %s60, %s61
      %p65 = pneg %p59
      %p66 = scmp.eq.s32.totalorder %s15, 1
      %p67 = por %p65, %p66
      %p68 = scmp.ne.s32.totalorder %s60, %s63
      %p69 = scmp.eq.s32.totalorder %s15, 0
      %p70 = por %p68, %p69
      %p71 = scmp.ne.s32.totalorder %s60, %s63
      %p72 = scmp.eq.s32.totalorder %s20, 1
      %p73 = por %p71, %p72
      %p74 = scmp.ne.s32.totalorder %s63, %s64
      %p75 = scmp.eq.s32.totalorder %s20, 0
      %p76 = por %p74, %p75
      %p77 = scmp.ne.s32.totalorder %s63, %s64
      %p78 = scmp.eq.s32.totalorder %s21, 1
      %p79 = por %p77, %p78
      %p81 = scmp.ne.s32.totalorder %s64, %s80
      %p82 = scmp.eq.s32.totalorder %s21, 0
      %p83 = por %p81, %p82
      %s84 = ssub.s32 %s22, %s34
      %p85 = scmp.eq.s32.totalorder %s84, 0
      %s87 = sadd.s32 %s86, 1
      %s88 = scalar_select %p85, %s86, %s87
      %p91 = pneg %p85
      %p92 = scmp.eq.s32.totalorder %s15, 1
      %p93 = por %p91, %p92
      %p94 = scmp.ne.s32.totalorder %s86, %s89
      %p95 = scmp.eq.s32.totalorder %s15, 0
      %p96 = por %p94, %p95
      %p97 = scmp.ne.s32.totalorder %s86, %s89
      %p98 = scmp.eq.s32.totalorder %s20, 1
      %p99 = por %p97, %p98
      %p100 = scmp.ne.s32.totalorder %s89, %s90
      %p101 = scmp.eq.s32.totalorder %s20, 0
      %p102 = por %p100, %p101
      %p103 = scmp.ne.s32.totalorder %s89, %s90
      %p104 = scmp.eq.s32.totalorder %s21, 1
      %p105 = por %p103, %p104
      %p107 = scmp.ne.s32.totalorder %s90, %s106
      %p108 = scmp.eq.s32.totalorder %s21, 0
      %p109 = por %p107, %p108
      %p110 = scmp.le.s32.totalorder 1, %s15
      %p111 = scmp.lt.s32.totalorder %s15, 3
      %p112 = pnand %p110, %p111
      %p113 = pneg %p112
      // Predicated region
      $region9: #{tpu_custom_call.1} parent=5 // pred_check
        _
      $region10: #{tpu_custom_call.1} parent=5 // pred_check_branch
        %115 = sbr.rel (%p112) target = $region12
      $region11: #{tpu_custom_call.1} parent=5 // pred_region
        %s116 = ssub.s32 %s15, 1
        // Predicated region
        $region13: #{tpu_custom_call.1} parent=11 // pred_check
          %p117 = pneg %p48
        $region14: #{tpu_custom_call.1} parent=11 // pred_check_branch
          %119 = sbr.rel (%p117) target = $region16
        $region15: #{tpu_custom_call.1} parent=11 // pred_region
          %s121 = ssub.s32 16, 16
          %122 = vsyncadd [#allocation9], %s121
          %125 = dma.hbm_to_smem %s0, 16, [#allocation6], [#allocation9]
        $region16: #{tpu_custom_call.1} parent=11 // pred_fallthru
          _
      $region12: #{tpu_custom_call.1} parent=5 // pred_fallthru
        _
      %p126 = scmp.lt.s32.totalorder %s15, 2
      // Predicated region
      $region17: #{tpu_custom_call.1} parent=5 // pred_check
        %p127 = pneg %p126
      $region18: #{tpu_custom_call.1} parent=5 // pred_check_branch
        %129 = sbr.rel (%p127) target = $region20
      $region19: #{tpu_custom_call.1} parent=5 // pred_region
        // Predicated region
        $region21: #{tpu_custom_call.1} parent=19 // pred_check
          %p130 = pneg %p70
        $region22: #{tpu_custom_call.1} parent=19 // pred_check_branch
          %132 = sbr.rel (%p130) target = $region24
        $region23: #{tpu_custom_call.1} parent=19 // pred_region
          %s133 = sand.u32 %s60, 1
          %s134 = scalar_lea.sflag [#allocation7], %s133
          %s135 = sand.u32 %s60, 1
          %s136 = smul.addr %s135, 64
          %s137 = scalar_lea.vmem [#allocation10], %s136
          %s138 = smul.u32 4, %s23
          %s140 = ssub.s32 1024, 1024
          %141 = vsyncadd %s134, %s140
          %s142 = smul.addr %s138, 2
          %s143 = smul.addr %s22, 8
          %s144 = sadd.s32 %s142, %s143
          %s145 = smul.addr %s144, 128
          %s146 = scalar_lea.hbm %s1, %s145
          %s147 = sshll.u32 %s137, 4
          %s148 = int_to_ptr.vmem [resolvable:$true] %s147
          %153 = dma.hbm_to_vmem [thread:$0]  %s146, 1024, %s148, %s134, 128, 128, 8
        $region24: #{tpu_custom_call.1} parent=19 // pred_fallthru
          _
      $region20: #{tpu_custom_call.1} parent=5 // pred_fallthru
        _
      %p154 = scmp.le.s32.totalorder 1, %s15
      %p155 = scmp.lt.s32.totalorder %s15, 3
      %p156 = pnand %p154, %p155
      %p157 = pneg %p156
      // Predicated region
      $region25: #{tpu_custom_call.1} parent=5 // pred_check
        _
      $region26: #{tpu_custom_call.1} parent=5 // pred_check_branch
        %159 = sbr.rel (%p156) target = $region28
      $region27: #{tpu_custom_call.1} parent=5 // pred_region
        %s160 = ssub.s32 %s15, 1
        // Predicated region
        $region29: #{tpu_custom_call.1} parent=27 // pred_check
          %p161 = pneg %p48
        $region30: #{tpu_custom_call.1} parent=27 // pred_check_branch
          %163 = sbr.rel (%p161) target = $region32
        $region31: #{tpu_custom_call.1} parent=27 // pred_region
          %164 = dma.done [#allocation9], 16
        $region32: #{tpu_custom_call.1} parent=27 // pred_fallthru
          _
        %s165 = sand.u32 %s63, 1
        %s166 = scalar_lea.sflag [#allocation7], %s165
        %s167 = sand.u32 %s63, 1
        %s168 = smul.addr %s167, 64
        %s169 = scalar_lea.vmem [#allocation10], %s168
        // Predicated region
        $region33: #{tpu_custom_call.1} parent=27 // pred_check
          %p170 = pneg %p76
        $region34: #{tpu_custom_call.1} parent=27 // pred_check_branch
          %172 = sbr.rel (%p170) target = $region36
        $region35: #{tpu_custom_call.1} parent=27 // pred_region
          %173 = dma.done %s166, 1024
        $region36: #{tpu_custom_call.1} parent=27 // pred_fallthru
          _
        %174 = sfence
        %p175 = pneg %p48
        %p176 = pneg %p45
        %s177 = sand.u32 %s63, 1
        %s178 = scalar_lea.sflag [#allocation7], %s177
        %s179 = sand.u32 %s63, 1
        %s180 = smul.addr %s179, 64
        %s181 = scalar_lea.vmem [#allocation10], %s180
        %p182 = pneg %p76
        %p183 = pneg %p73
        %p184 = pneg %p102
        %p185 = pneg %p99
        %s186 = sand.u32 %s89, 1
        %s187 = scalar_lea.sflag [#allocation8], %s186
        %s188 = sand.u32 %s89, 1
        %s189 = smul.addr %s188, 16
        %s190 = scalar_lea.vmem [#allocation11], %s189
        %s191 = smul.u32 4, %s25
        %v192 = vld [vmem:[%s169] sm:$0xff]
        %v193 = vld [vmem:[%s169 + $0x8] sm:$0xff]
        %v194 = vld [vmem:[%s169 + $0x10] sm:$0xff]
        %v195 = vld [vmem:[%s169 + $0x18] sm:$0xff]
        %v196 = vld [vmem:[%s169 + $0x20] sm:$0xff]
        %v197 = vld [vmem:[%s169 + $0x28] sm:$0xff]
        %v198 = vld [vmem:[%s169 + $0x30] sm:$0xff]
        %v199 = vld [vmem:[%s169 + $0x38] sm:$0xff]
        %vm200 = vcmask 130048
        %v201 = vsel %vm200, %v192, 0.0
        %v202 = vsel %vm200, %v194, 0.0
        %v203 = vadd.f32 %v201, %v202
        %v204 = vsel %vm200, %v196, 0.0
        %v205 = vadd.f32 %v203, %v204
        %v206 = vsel %vm200, %v198, 0.0
        %v207 = vadd.f32 %v205, %v206
        %v208 = vsel %vm200, %v193, 0.0
        %v209 = vsel %vm200, %v195, 0.0
        %v210 = vadd.f32 %v208, %v209
        %v211 = vsel %vm200, %v197, 0.0
        %v212 = vadd.f32 %v210, %v211
        %v213 = vsel %vm200, %v199, 0.0
        %v214 = vadd.f32 %v212, %v213
        %v215 = vsel %vm200, %v192, -inf
        %v216 = vsel %vm200, %v194, -inf
        %v217 = vsel %vm200, %v196, -inf
        %v218 = vmax.f32 %v215, %v217
        %v219 = vsel %vm200, %v198, -inf
        %v220 = vmax.f32 %v216, %v219
        %v221 = vmax.f32 %v218, %v220
        %v222 = vsel %vm200, %v193, -inf
        %v223 = vsel %vm200, %v195, -inf
        %v224 = vsel %vm200, %v197, -inf
        %v225 = vmax.f32 %v222, %v224
        %v226 = vsel %vm200, %v199, -inf
        %v227 = vmax.f32 %v223, %v226
        %v228 = vmax.f32 %v225, %v227
        %p229 = scmp.eq.s32.totalorder %s25, 0
        // Predicated region
        $region37: #{tpu_custom_call.1} parent=27 // pred_check
          %p230 = pneg %p229
        $region38: #{tpu_custom_call.1} parent=27 // pred_check_branch
          %232 = sbr.rel (%p230) target = $region40
        $region39: #{tpu_custom_call.1} parent=27 // pred_region
          %233 = vst.msk [vmem:[#allocation2] sm:$0xff] %vm200, 0.0
          %234 = vst.msk [vmem:[#allocation2 + $0x8] sm:$0xff] %vm200, 0.0
          %235 = vst.msk [vmem:[#allocation3] sm:$0xff] %vm200, -inf
          %236 = vst.msk [vmem:[#allocation3 + $0x8] sm:$0xff] %vm200, -inf
        $region40: #{tpu_custom_call.1} parent=27 // pred_fallthru
          _
        %v237 = vld [vmem:[#allocation2] sm:$0xff]
        %v238 = vld [vmem:[#allocation2 + $0x8] sm:$0xff]
        %v239 = vadd.f32 %v237, %v207
        %v240 = vadd.f32 %v238, %v214
        %241 = vst.msk [vmem:[#allocation2] sm:$0xff] %vm200, %v239
        %242 = vst.msk [vmem:[#allocation2 + $0x8] sm:$0xff] %vm200, %v240
        %v243 = vld [vmem:[#allocation3] sm:$0xff]
        %v244 = vld [vmem:[#allocation3 + $0x8] sm:$0xff]
        %v245 = vmax.f32 %v243, %v221
        %v246 = vmax.f32 %v244, %v228
        %247 = vst.msk [vmem:[#allocation3] sm:$0xff] %vm200, %v245
        %248 = vst.msk [vmem:[#allocation3 + $0x8] sm:$0xff] %vm200, %v246
        // Predicated region
        $region41: #{tpu_custom_call.1} parent=27 // pred_check
          %p249 = pneg %p229
        $region42: #{tpu_custom_call.1} parent=27 // pred_check_branch
          %251 = sbr.rel (%p249) target = $region44
        $region43: #{tpu_custom_call.1} parent=27 // pred_region
          %v252 = vld [vmem:[#allocation2] sm:$0xff]
          %v253 = vld [vmem:[#allocation2 + $0x8] sm:$0xff]
          %v254 = vmul.f32 %v252, 0.25
          %v255 = vmul.f32 %v253, 0.25
          %v256 = vld [vmem:[#allocation3] sm:$0xff]
          %v257 = vld [vmem:[#allocation3 + $0x8] sm:$0xff]
          %258 = vst [vmem:[#allocation4] sm:$0xff] 0.0
          %vm259 = vcmask 154624
          %260 = vst.msk [vmem:[#allocation4 + $0x8] sm:$0xff] %vm259, 0.0
          %261 = vst [vmem:[#allocation4 + $0x10] sm:$0xff] 0.0
          %262 = vst.msk [vmem:[#allocation4 + $0x18] sm:$0xff] %vm259, 0.0
          %263 = vst [vmem:[#allocation4 + $0x20] sm:$0xff] 0.0
          %264 = vst.msk [vmem:[#allocation4 + $0x28] sm:$0xff] %vm259, 0.0
          %265 = vst [vmem:[#allocation4 + $0x30] sm:$0x7] 0.0
          %vm266 = vcmask 149504
          %267 = vst.msk [vmem:[#allocation4 + $0x38] sm:$0x7] %vm266, 0.0
          %268 = vst [vmem:[#allocation5] sm:$0xff] 0.0
          %269 = vst.msk [vmem:[#allocation5 + $0x8] sm:$0xff] %vm259, 0.0
          %270 = vst [vmem:[#allocation5 + $0x10] sm:$0xff] 0.0
          %271 = vst.msk [vmem:[#allocation5 + $0x18] sm:$0xff] %vm259, 0.0
          %272 = vst [vmem:[#allocation5 + $0x20] sm:$0xff] 0.0
          %273 = vst.msk [vmem:[#allocation5 + $0x28] sm:$0xff] %vm259, 0.0
          %274 = vst [vmem:[#allocation5 + $0x30] sm:$0x7] 0.0
          %275 = vst.msk [vmem:[#allocation5 + $0x38] sm:$0x7] %vm266, 0.0
          %276 = vst.msk [vmem:[#allocation4 + $0x18] sm:$0xff] %vm200, %v254
          %277 = vst.msk [vmem:[#allocation4 + $0x28] sm:$0xff] %vm200, %v255
          %278 = vst.msk [vmem:[#allocation5 + $0x18] sm:$0xff] %vm200, %v256
          %279 = vst.msk [vmem:[#allocation5 + $0x28] sm:$0xff] %vm200, %v257
          %v280 = vld [vmem:[#allocation4] sm:$0xff]
          %v281 = vld [vmem:[#allocation4 + $0x8] sm:$0xff]
          %v282 = vld [vmem:[#allocation4 + $0x10] sm:$0xff]
          %v283 = vld [vmem:[#allocation4 + $0x18] sm:$0xff]
          %v284 = vld [vmem:[#allocation4 + $0x20] sm:$0xff]
          %v285 = vld [vmem:[#allocation4 + $0x28] sm:$0xff]
          %v286 = vld [vmem:[#allocation4 + $0x30] sm:$0x7]
          %v287 = vld [vmem:[#allocation4 + $0x38] sm:$0x7]
          %v288 = vld [vmem:[#allocation5] sm:$0xff]
          %v289 = vld [vmem:[#allocation5 + $0x8] sm:$0xff]
          %v290 = vld [vmem:[#allocation5 + $0x10] sm:$0xff]
          %v291 = vld [vmem:[#allocation5 + $0x18] sm:$0xff]
          %v292 = vld [vmem:[#allocation5 + $0x20] sm:$0xff]
          %v293 = vld [vmem:[#allocation5 + $0x28] sm:$0xff]
          %v294 = vld [vmem:[#allocation5 + $0x30] sm:$0x7]
          %v295 = vld [vmem:[#allocation5 + $0x38] sm:$0x7]
          %s296 = sld [smem:[#allocation6]]
          %v297 = vstv %s296
          %v298 = vmul.f32 %v297, %v280
          %v299 = vmul.f32 %v297, %v281
          %v300 = vmul.f32 %v297, %v282
          %v301 = vmul.f32 %v297, %v283
          %v302 = vmul.f32 %v297, %v284
          %v303 = vmul.f32 %v297, %v285
          %s304 = sld [smem:[#allocation6 + $0x31]]
          %v305 = vstv %s304
          %v306 = vmul.f32 %v305, %v288
          %v307 = vmul.f32 %v305, %v289
          %v308 = vmul.f32 %v305, %v290
          %v309 = vmul.f32 %v305, %v291
          %v310 = vmul.f32 %v305, %v292
          %v311 = vmul.f32 %v305, %v293
          %v312 = vadd.f32 %v298, %v306
          %v313 = vadd.f32 %v299, %v307
          %v314 = vadd.f32 %v300, %v308
          %v315 = vadd.f32 %v301, %v309
          %v316 = vadd.f32 %v302, %v310
          %v317 = vadd.f32 %v303, %v311
          %s318 = sld [smem:[#allocation6 + $0x7]]
          %v319 = vstv %s318
          %v320 = vmul.f32 %v319, %v280
          %v321 = vmul.f32 %v319, %v281
          %v322 = vmul.f32 %v319, %v282
          %v323 = vmul.f32 %v319, %v283
          %v324 = vmul.f32 %v319, %v284
          %v325 = vmul.f32 %v319, %v285
          %vm332 = vcmask 1046528
          %v333 = vrot.slane %v320, 1
          %v334 = vrot.slane %v322, 1
          %v335 = vsel %vm332, %v333, %v334
          %v336 = vrot.slane %v321, 1
          %v337 = vrot.slane %v323, 1
          %v338 = vsel %vm332, %v336, %v337
          %v339 = vrot.slane %v324, 1
          %v340 = vsel %vm332, %v334, %v339
          %v341 = vrot.slane %v325, 1
          %v342 = vsel %vm332, %v337, %v341
          %v349 = vadd.f32 %v312, %v335
          %v350 = vadd.f32 %v313, %v338
          %v351 = vadd.f32 %v314, %v340
          %v352 = vadd.f32 %v315, %v342
          %v353 = vadd.f32 %v316, %v339
          %v354 = vadd.f32 %v317, %v341
          %s355 = sld [smem:[#allocation6 + $0x38]]
          %v356 = vstv %s355
          %v357 = vmul.f32 %v356, %v288
          %v358 = vmul.f32 %v356, %v289
          %v359 = vmul.f32 %v356, %v290
          %v360 = vmul.f32 %v356, %v291
          %v361 = vmul.f32 %v356, %v292
          %v362 = vmul.f32 %v356, %v293
          %v369 = vrot.slane %v357, 1
          %v370 = vrot.slane %v359, 1
          %v371 = vsel %vm332, %v369, %v370
          %v372 = vrot.slane %v358, 1
          %v373 = vrot.slane %v360, 1
          %v374 = vsel %vm332, %v372, %v373
          %v375 = vrot.slane %v361, 1
          %v376 = vsel %vm332, %v370, %v375
          %v377 = vrot.slane %v362, 1
          %v378 = vsel %vm332, %v373, %v377
          %v385 = vadd.f32 %v349, %v371
          %v386 = vadd.f32 %v350, %v374
          %v387 = vadd.f32 %v351, %v376
          %v388 = vadd.f32 %v352, %v378
          %v389 = vadd.f32 %v353, %v375
          %v390 = vadd.f32 %v354, %v377
          %s391 = sld [smem:[#allocation6 + $0xe]]
          %v392 = vstv %s391
          %v393 = vmul.f32 %v392, %v280
          %v394 = vmul.f32 %v392, %v281
          %v395 = vmul.f32 %v392, %v282
          %v396 = vmul.f32 %v392, %v283
          %v397 = vmul.f32 %v392, %v284
          %v398 = vmul.f32 %v392, %v285
          %vm405 = vcmask 1045504
          %v406 = vrot.slane %v393, 2
          %v407 = vrot.slane %v395, 2
          %v408 = vsel %vm405, %v406, %v407
          %v409 = vrot.slane %v394, 2
          %v410 = vrot.slane %v396, 2
          %v411 = vsel %vm405, %v409, %v410
          %v412 = vrot.slane %v397, 2
          %v413 = vsel %vm405, %v407, %v412
          %v414 = vrot.slane %v398, 2
          %v415 = vsel %vm405, %v410, %v414
          %v422 = vadd.f32 %v385, %v408
          %v423 = vadd.f32 %v386, %v411
          %v424 = vadd.f32 %v387, %v413
          %v425 = vadd.f32 %v388, %v415
          %v426 = vadd.f32 %v389, %v412
          %v427 = vadd.f32 %v390, %v414
          %s428 = sld [smem:[#allocation6 + $0x3f]]
          %v429 = vstv %s428
          %v430 = vmul.f32 %v429, %v288
          %v431 = vmul.f32 %v429, %v289
          %v432 = vmul.f32 %v429, %v290
          %v433 = vmul.f32 %v429, %v291
          %v434 = vmul.f32 %v429, %v292
          %v435 = vmul.f32 %v429, %v293
          %v442 = vrot.slane %v430, 2
          %v443 = vrot.slane %v432, 2
          %v444 = vsel %vm405, %v442, %v443
          %v445 = vrot.slane %v431, 2
          %v446 = vrot.slane %v433, 2
          %v447 = vsel %vm405, %v445, %v446
          %v448 = vrot.slane %v434, 2
          %v449 = vsel %vm405, %v443, %v448
          %v450 = vrot.slane %v435, 2
          %v451 = vsel %vm405, %v446, %v450
          %v458 = vadd.f32 %v422, %v444
          %v459 = vadd.f32 %v423, %v447
          %v460 = vadd.f32 %v424, %v449
          %v461 = vadd.f32 %v425, %v451
          %v462 = vadd.f32 %v426, %v448
          %v463 = vadd.f32 %v427, %v450
          %s464 = sld [smem:[#allocation6 + $0x15]]
          %v465 = vstv %s464
          %v466 = vmul.f32 %v465, %v282
          %v467 = vmul.f32 %v465, %v283
          %v468 = vmul.f32 %v465, %v284
          %v469 = vmul.f32 %v465, %v285
          %vm474 = vcmask 1044480
          %v475 = vrot.slane %v466, 3
          %v476 = vrot.slane %v467, 3
          %v477 = vrot.slane %v468, 3
          %v478 = vsel %vm474, %v475, %v477
          %v479 = vrot.slane %v469, 3
          %v480 = vsel %vm474, %v476, %v479
          %v487 = vadd.f32 %v458, %v475
          %v488 = vadd.f32 %v459, %v476
          %v489 = vadd.f32 %v460, %v478
          %v490 = vadd.f32 %v461, %v480
          %v491 = vadd.f32 %v462, %v477
          %v492 = vadd.f32 %v463, %v479
          %s493 = sld [smem:[#allocation6 + $0x46]]
          %v494 = vstv %s493
          %v495 = vmul.f32 %v494, %v290
          %v496 = vmul.f32 %v494, %v291
          %v497 = vmul.f32 %v494, %v292
          %v498 = vmul.f32 %v494, %v293
          %v503 = vrot.slane %v495, 3
          %v504 = vrot.slane %v496, 3
          %v505 = vrot.slane %v497, 3
          %v506 = vsel %vm474, %v503, %v505
          %v507 = vrot.slane %v498, 3
          %v508 = vsel %vm474, %v504, %v507
          %v515 = vadd.f32 %v487, %v503
          %v516 = vadd.f32 %v488, %v504
          %v517 = vadd.f32 %v489, %v506
          %v518 = vadd.f32 %v490, %v508
          %v519 = vadd.f32 %v491, %v505
          %v520 = vadd.f32 %v492, %v507
          %s521 = sld [smem:[#allocation6 + $0x1c]]
          %v522 = vstv %s521
          %v523 = vmul.f32 %v522, %v282
          %v524 = vmul.f32 %v522, %v283
          %v525 = vmul.f32 %v522, %v284
          %v526 = vmul.f32 %v522, %v285
          %v527 = vmul.f32 %v522, %v286
          %v528 = vmul.f32 %v522, %v287
          %vm535 = vcmask 1043456
          %v536 = vrot.slane %v523, 4
          %v537 = vrot.slane %v524, 4
          %v538 = vrot.slane %v525, 4
          %v539 = vsel %vm535, %v536, %v538
          %v540 = vrot.slane %v526, 4
          %v541 = vsel %vm535, %v537, %v540
          %v542 = vrot.slane %v527, 4
          %v543 = vsel %vm535, %v538, %v542
          %v544 = vrot.slane %v528, 4
          %v545 = vsel %vm535, %v540, %v544
          %v552 = vadd.f32 %v515, %v536
          %v553 = vadd.f32 %v516, %v537
          %v554 = vadd.f32 %v517, %v539
          %v555 = vadd.f32 %v518, %v541
          %v556 = vadd.f32 %v519, %v543
          %v557 = vadd.f32 %v520, %v545
          %s558 = sld [smem:[#allocation6 + $0x4d]]
          %v559 = vstv %s558
          %v560 = vmul.f32 %v559, %v290
          %v561 = vmul.f32 %v559, %v291
          %v562 = vmul.f32 %v559, %v292
          %v563 = vmul.f32 %v559, %v293
          %v564 = vmul.f32 %v559, %v294
          %v565 = vmul.f32 %v559, %v295
          %v572 = vrot.slane %v560, 4
          %v573 = vrot.slane %v561, 4
          %v574 = vrot.slane %v562, 4
          %v575 = vsel %vm535, %v572, %v574
          %v576 = vrot.slane %v563, 4
          %v577 = vsel %vm535, %v573, %v576
          %v578 = vrot.slane %v564, 4
          %v579 = vsel %vm535, %v574, %v578
          %v580 = vrot.slane %v565, 4
          %v581 = vsel %vm535, %v576, %v580
          %v588 = vadd.f32 %v552, %v572
          %v589 = vadd.f32 %v553, %v573
          %v590 = vadd.f32 %v554, %v575
          %v591 = vadd.f32 %v555, %v577
          %v592 = vadd.f32 %v556, %v579
          %v593 = vadd.f32 %v557, %v581
          %s594 = sld [smem:[#allocation6 + $0x23]]
          %v595 = vstv %s594
          %v596 = vmul.f32 %v595, %v282
          %v597 = vmul.f32 %v595, %v283
          %v598 = vmul.f32 %v595, %v284
          %v599 = vmul.f32 %v595, %v285
          %v600 = vmul.f32 %v595, %v286
          %v601 = vmul.f32 %v595, %v287
          %vm608 = vcmask 1042432
          %v609 = vrot.slane %v596, 5
          %v610 = vrot.slane %v597, 5
          %v611 = vrot.slane %v598, 5
          %v612 = vsel %vm608, %v609, %v611
          %v613 = vrot.slane %v599, 5
          %v614 = vsel %vm608, %v610, %v613
          %v615 = vrot.slane %v600, 5
          %v616 = vsel %vm608, %v611, %v615
          %v617 = vrot.slane %v601, 5
          %v618 = vsel %vm608, %v613, %v617
          %v625 = vadd.f32 %v588, %v609
          %v626 = vadd.f32 %v589, %v610
          %v627 = vadd.f32 %v590, %v612
          %v628 = vadd.f32 %v591, %v614
          %v629 = vadd.f32 %v592, %v616
          %v630 = vadd.f32 %v593, %v618
          %s631 = sld [smem:[#allocation6 + $0x54]]
          %v632 = vstv %s631
          %v633 = vmul.f32 %v632, %v290
          %v634 = vmul.f32 %v632, %v291
          %v635 = vmul.f32 %v632, %v292
          %v636 = vmul.f32 %v632, %v293
          %v637 = vmul.f32 %v632, %v294
          %v638 = vmul.f32 %v632, %v295
          %v645 = vrot.slane %v633, 5
          %v646 = vrot.slane %v634, 5
          %v647 = vrot.slane %v635, 5
          %v648 = vsel %vm608, %v645, %v647
          %v649 = vrot.slane %v636, 5
          %v650 = vsel %vm608, %v646, %v649
          %v651 = vrot.slane %v637, 5
          %v652 = vsel %vm608, %v647, %v651
          %v653 = vrot.slane %v638, 5
          %v654 = vsel %vm608, %v649, %v653
          %v661 = vadd.f32 %v625, %v645
          %v662 = vadd.f32 %v626, %v646
          %v663 = vadd.f32 %v627, %v648
          %v664 = vadd.f32 %v628, %v650
          %v665 = vadd.f32 %v629, %v652
          %v666 = vadd.f32 %v630, %v654
          %s667 = sld [smem:[#allocation6 + $0x2a]]
          %v668 = vstv %s667
          %v669 = vmul.f32 %v668, %v282
          %v670 = vmul.f32 %v668, %v283
          %v671 = vmul.f32 %v668, %v284
          %v672 = vmul.f32 %v668, %v285
          %v673 = vmul.f32 %v668, %v286
          %v674 = vmul.f32 %v668, %v287
          %vm681 = vcmask 1041408
          %v682 = vrot.slane %v669, 6
          %v683 = vrot.slane %v670, 6
          %v684 = vrot.slane %v671, 6
          %v685 = vsel %vm681, %v682, %v684
          %v686 = vrot.slane %v672, 6
          %v687 = vsel %vm681, %v683, %v686
          %v688 = vrot.slane %v673, 6
          %v689 = vsel %vm681, %v684, %v688
          %v690 = vrot.slane %v674, 6
          %v691 = vsel %vm681, %v686, %v690
          %v698 = vadd.f32 %v661, %v682
          %v699 = vadd.f32 %v662, %v683
          %v700 = vadd.f32 %v663, %v685
          %v701 = vadd.f32 %v664, %v687
          %v702 = vadd.f32 %v665, %v689
          %v703 = vadd.f32 %v666, %v691
          %s704 = sld [smem:[#allocation6 + $0x5b]]
          %v705 = vstv %s704
          %v706 = vmul.f32 %v705, %v290
          %v707 = vmul.f32 %v705, %v291
          %v708 = vmul.f32 %v705, %v292
          %v709 = vmul.f32 %v705, %v293
          %v710 = vmul.f32 %v705, %v294
          %v711 = vmul.f32 %v705, %v295
          %v718 = vrot.slane %v706, 6
          %v719 = vrot.slane %v707, 6
          %v720 = vrot.slane %v708, 6
          %v721 = vsel %vm681, %v718, %v720
          %v722 = vrot.slane %v709, 6
          %v723 = vsel %vm681, %v719, %v722
          %v724 = vrot.slane %v710, 6
          %v725 = vsel %vm681, %v720, %v724
          %v726 = vrot.slane %v711, 6
          %v727 = vsel %vm681, %v722, %v726
          %v734 = vadd.f32 %v698, %v718
          %v735 = vadd.f32 %v699, %v719
          %v736 = vadd.f32 %v700, %v721
          %v737 = vadd.f32 %v701, %v723
          %v738 = vadd.f32 %v702, %v725
          %v739 = vadd.f32 %v703, %v727
          %s740 = sld [smem:[#allocation6 + $0x1]]
          %v741 = vstv %s740
          %v742 = vmul.f32 %v741, %v280
          %v743 = vmul.f32 %v741, %v281
          %v744 = vmul.f32 %v741, %v282
          %v745 = vmul.f32 %v741, %v283
          %v746 = vmul.f32 %v741, %v284
          %v747 = vmul.f32 %v741, %v285
          %s748 = sld [smem:[#allocation6 + $0x32]]
          %v749 = vstv %s748
          %v750 = vmul.f32 %v749, %v288
          %v751 = vmul.f32 %v749, %v289
          %v752 = vmul.f32 %v749, %v290
          %v753 = vmul.f32 %v749, %v291
          %v754 = vmul.f32 %v749, %v292
          %v755 = vmul.f32 %v749, %v293
          %v756 = vadd.f32 %v742, %v750
          %v757 = vadd.f32 %v743, %v751
          %v758 = vadd.f32 %v744, %v752
          %v759 = vadd.f32 %v745, %v753
          %v760 = vadd.f32 %v746, %v754
          %v761 = vadd.f32 %v747, %v755
          %s762 = sld [smem:[#allocation6 + $0x8]]
          %v763 = vstv %s762
          %v764 = vmul.f32 %v763, %v280
          %v765 = vmul.f32 %v763, %v281
          %v766 = vmul.f32 %v763, %v282
          %v767 = vmul.f32 %v763, %v283
          %v768 = vmul.f32 %v763, %v284
          %v769 = vmul.f32 %v763, %v285
          %v776 = vrot.slane %v764, 1
          %v777 = vrot.slane %v766, 1
          %v778 = vsel %vm332, %v776, %v777
          %v779 = vrot.slane %v765, 1
          %v780 = vrot.slane %v767, 1
          %v781 = vsel %vm332, %v779, %v780
          %v782 = vrot.slane %v768, 1
          %v783 = vsel %vm332, %v777, %v782
          %v784 = vrot.slane %v769, 1
          %v785 = vsel %vm332, %v780, %v784
          %v792 = vadd.f32 %v756, %v778
          %v793 = vadd.f32 %v757, %v781
          %v794 = vadd.f32 %v758, %v783
          %v795 = vadd.f32 %v759, %v785
          %v796 = vadd.f32 %v760, %v782
          %v797 = vadd.f32 %v761, %v784
          %s798 = sld [smem:[#allocation6 + $0x39]]
          %v799 = vstv %s798
          %v800 = vmul.f32 %v799, %v288
          %v801 = vmul.f32 %v799, %v289
          %v802 = vmul.f32 %v799, %v290
          %v803 = vmul.f32 %v799, %v291
          %v804 = vmul.f32 %v799, %v292
          %v805 = vmul.f32 %v799, %v293
          %v812 = vrot.slane %v800, 1
          %v813 = vrot.slane %v802, 1
          %v814 = vsel %vm332, %v812, %v813
          %v815 = vrot.slane %v801, 1
          %v816 = vrot.slane %v803, 1
          %v817 = vsel %vm332, %v815, %v816
          %v818 = vrot.slane %v804, 1
          %v819 = vsel %vm332, %v813, %v818
          %v820 = vrot.slane %v805, 1
          %v821 = vsel %vm332, %v816, %v820
          %v828 = vadd.f32 %v792, %v814
          %v829 = vadd.f32 %v793, %v817
          %v830 = vadd.f32 %v794, %v819
          %v831 = vadd.f32 %v795, %v821
          %v832 = vadd.f32 %v796, %v818
          %v833 = vadd.f32 %v797, %v820
          %s834 = sld [smem:[#allocation6 + $0xf]]
          %v835 = vstv %s834
          %v836 = vmul.f32 %v835, %v280
          %v837 = vmul.f32 %v835, %v281
          %v838 = vmul.f32 %v835, %v282
          %v839 = vmul.f32 %v835, %v283
          %v840 = vmul.f32 %v835, %v284
          %v841 = vmul.f32 %v835, %v285
          %v848 = vrot.slane %v836, 2
          %v849 = vrot.slane %v838, 2
          %v850 = vsel %vm405, %v848, %v849
          %v851 = vrot.slane %v837, 2
          %v852 = vrot.slane %v839, 2
          %v853 = vsel %vm405, %v851, %v852
          %v854 = vrot.slane %v840, 2
          %v855 = vsel %vm405, %v849, %v854
          %v856 = vrot.slane %v841, 2
          %v857 = vsel %vm405, %v852, %v856
          %v864 = vadd.f32 %v828, %v850
          %v865 = vadd.f32 %v829, %v853
          %v866 = vadd.f32 %v830, %v855
          %v867 = vadd.f32 %v831, %v857
          %v868 = vadd.f32 %v832, %v854
          %v869 = vadd.f32 %v833, %v856
          %s870 = sld [smem:[#allocation6 + $0x40]]
          %v871 = vstv %s870
          %v872 = vmul.f32 %v871, %v288
          %v873 = vmul.f32 %v871, %v289
          %v874 = vmul.f32 %v871, %v290
          %v875 = vmul.f32 %v871, %v291
          %v876 = vmul.f32 %v871, %v292
          %v877 = vmul.f32 %v871, %v293
          %v884 = vrot.slane %v872, 2
          %v885 = vrot.slane %v874, 2
          %v886 = vsel %vm405, %v884, %v885
          %v887 = vrot.slane %v873, 2
          %v888 = vrot.slane %v875, 2
          %v889 = vsel %vm405, %v887, %v888
          %v890 = vrot.slane %v876, 2
          %v891 = vsel %vm405, %v885, %v890
          %v892 = vrot.slane %v877, 2
          %v893 = vsel %vm405, %v888, %v892
          %v900 = vadd.f32 %v864, %v886
          %v901 = vadd.f32 %v865, %v889
          %v902 = vadd.f32 %v866, %v891
          %v903 = vadd.f32 %v867, %v893
          %v904 = vadd.f32 %v868, %v890
          %v905 = vadd.f32 %v869, %v892
          %s906 = sld [smem:[#allocation6 + $0x16]]
          %v907 = vstv %s906
          %v908 = vmul.f32 %v907, %v282
          %v909 = vmul.f32 %v907, %v283
          %v910 = vmul.f32 %v907, %v284
          %v911 = vmul.f32 %v907, %v285
          %v916 = vrot.slane %v908, 3
          %v917 = vrot.slane %v909, 3
          %v918 = vrot.slane %v910, 3
          %v919 = vsel %vm474, %v916, %v918
          %v920 = vrot.slane %v911, 3
          %v921 = vsel %vm474, %v917, %v920
          %v928 = vadd.f32 %v900, %v916
          %v929 = vadd.f32 %v901, %v917
          %v930 = vadd.f32 %v902, %v919
          %v931 = vadd.f32 %v903, %v921
          %v932 = vadd.f32 %v904, %v918
          %v933 = vadd.f32 %v905, %v920
          %s934 = sld [smem:[#allocation6 + $0x47]]
          %v935 = vstv %s934
          %v936 = vmul.f32 %v935, %v290
          %v937 = vmul.f32 %v935, %v291
          %v938 = vmul.f32 %v935, %v292
          %v939 = vmul.f32 %v935, %v293
          %v944 = vrot.slane %v936, 3
          %v945 = vrot.slane %v937, 3
          %v946 = vrot.slane %v938, 3
          %v947 = vsel %vm474, %v944, %v946
          %v948 = vrot.slane %v939, 3
          %v949 = vsel %vm474, %v945, %v948
          %v956 = vadd.f32 %v928, %v944
          %v957 = vadd.f32 %v929, %v945
          %v958 = vadd.f32 %v930, %v947
          %v959 = vadd.f32 %v931, %v949
          %v960 = vadd.f32 %v932, %v946
          %v961 = vadd.f32 %v933, %v948
          %s962 = sld [smem:[#allocation6 + $0x1d]]
          %v963 = vstv %s962
          %v964 = vmul.f32 %v963, %v282
          %v965 = vmul.f32 %v963, %v283
          %v966 = vmul.f32 %v963, %v284
          %v967 = vmul.f32 %v963, %v285
          %v968 = vmul.f32 %v963, %v286
          %v969 = vmul.f32 %v963, %v287
          %v976 = vrot.slane %v964, 4
          %v977 = vrot.slane %v965, 4
          %v978 = vrot.slane %v966, 4
          %v979 = vsel %vm535, %v976, %v978
          %v980 = vrot.slane %v967, 4
          %v981 = vsel %vm535, %v977, %v980
          %v982 = vrot.slane %v968, 4
          %v983 = vsel %vm535, %v978, %v982
          %v984 = vrot.slane %v969, 4
          %v985 = vsel %vm535, %v980, %v984
          %v992 = vadd.f32 %v956, %v976
          %v993 = vadd.f32 %v957, %v977
          %v994 = vadd.f32 %v958, %v979
          %v995 = vadd.f32 %v959, %v981
          %v996 = vadd.f32 %v960, %v983
          %v997 = vadd.f32 %v961, %v985
          %s998 = sld [smem:[#allocation6 + $0x4e]]
          %v999 = vstv %s998
          %v1000 = vmul.f32 %v999, %v290
          %v1001 = vmul.f32 %v999, %v291
          %v1002 = vmul.f32 %v999, %v292
          %v1003 = vmul.f32 %v999, %v293
          %v1004 = vmul.f32 %v999, %v294
          %v1005 = vmul.f32 %v999, %v295
          %v1012 = vrot.slane %v1000, 4
          %v1013 = vrot.slane %v1001, 4
          %v1014 = vrot.slane %v1002, 4
          %v1015 = vsel %vm535, %v1012, %v1014
          %v1016 = vrot.slane %v1003, 4
          %v1017 = vsel %vm535, %v1013, %v1016
          %v1018 = vrot.slane %v1004, 4
          %v1019 = vsel %vm535, %v1014, %v1018
          %v1020 = vrot.slane %v1005, 4
          %v1021 = vsel %vm535, %v1016, %v1020
          %v1028 = vadd.f32 %v992, %v1012
          %v1029 = vadd.f32 %v993, %v1013
          %v1030 = vadd.f32 %v994, %v1015
          %v1031 = vadd.f32 %v995, %v1017
          %v1032 = vadd.f32 %v996, %v1019
          %v1033 = vadd.f32 %v997, %v1021
          %s1034 = sld [smem:[#allocation6 + $0x24]]
          %v1035 = vstv %s1034
          %v1036 = vmul.f32 %v1035, %v282
          %v1037 = vmul.f32 %v1035, %v283
          %v1038 = vmul.f32 %v1035, %v284
          %v1039 = vmul.f32 %v1035, %v285
          %v1040 = vmul.f32 %v1035, %v286
          %v1041 = vmul.f32 %v1035, %v287
          %v1048 = vrot.slane %v1036, 5
          %v1049 = vrot.slane %v1037, 5
          %v1050 = vrot.slane %v1038, 5
          %v1051 = vsel %vm608, %v1048, %v1050
          %v1052 = vrot.slane %v1039, 5
          %v1053 = vsel %vm608, %v1049, %v1052
          %v1054 = vrot.slane %v1040, 5
          %v1055 = vsel %vm608, %v1050, %v1054
          %v1056 = vrot.slane %v1041, 5
          %v1057 = vsel %vm608, %v1052, %v1056
          %v1064 = vadd.f32 %v1028, %v1048
          %v1065 = vadd.f32 %v1029, %v1049
          %v1066 = vadd.f32 %v1030, %v1051
          %v1067 = vadd.f32 %v1031, %v1053
          %v1068 = vadd.f32 %v1032, %v1055
          %v1069 = vadd.f32 %v1033, %v1057
          %s1070 = sld [smem:[#allocation6 + $0x55]]
          %v1071 = vstv %s1070
          %v1072 = vmul.f32 %v1071, %v290
          %v1073 = vmul.f32 %v1071, %v291
          %v1074 = vmul.f32 %v1071, %v292
          %v1075 = vmul.f32 %v1071, %v293
          %v1076 = vmul.f32 %v1071, %v294
          %v1077 = vmul.f32 %v1071, %v295
          %v1084 = vrot.slane %v1072, 5
          %v1085 = vrot.slane %v1073, 5
          %v1086 = vrot.slane %v1074, 5
          %v1087 = vsel %vm608, %v1084, %v1086
          %v1088 = vrot.slane %v1075, 5
          %v1089 = vsel %vm608, %v1085, %v1088
          %v1090 = vrot.slane %v1076, 5
          %v1091 = vsel %vm608, %v1086, %v1090
          %v1092 = vrot.slane %v1077, 5
          %v1093 = vsel %vm608, %v1088, %v1092
          %v1100 = vadd.f32 %v1064, %v1084
          %v1101 = vadd.f32 %v1065, %v1085
          %v1102 = vadd.f32 %v1066, %v1087
          %v1103 = vadd.f32 %v1067, %v1089
          %v1104 = vadd.f32 %v1068, %v1091
          %v1105 = vadd.f32 %v1069, %v1093
          %s1106 = sld [smem:[#allocation6 + $0x2b]]
          %v1107 = vstv %s1106
          %v1108 = vmul.f32 %v1107, %v282
          %v1109 = vmul.f32 %v1107, %v283
          %v1110 = vmul.f32 %v1107, %v284
          %v1111 = vmul.f32 %v1107, %v285
          %v1112 = vmul.f32 %v1107, %v286
          %v1113 = vmul.f32 %v1107, %v287
          %v1120 = vrot.slane %v1108, 6
          %v1121 = vrot.slane %v1109, 6
          %v1122 = vrot.slane %v1110, 6
          %v1123 = vsel %vm681, %v1120, %v1122
          %v1124 = vrot.slane %v1111, 6
          %v1125 = vsel %vm681, %v1121, %v1124
          %v1126 = vrot.slane %v1112, 6
          %v1127 = vsel %vm681, %v1122, %v1126
          %v1128 = vrot.slane %v1113, 6
          %v1129 = vsel %vm681, %v1124, %v1128
          %v1136 = vadd.f32 %v1100, %v1120
          %v1137 = vadd.f32 %v1101, %v1121
          %v1138 = vadd.f32 %v1102, %v1123
          %v1139 = vadd.f32 %v1103, %v1125
          %v1140 = vadd.f32 %v1104, %v1127
          %v1141 = vadd.f32 %v1105, %v1129
          %s1142 = sld [smem:[#allocation6 + $0x5c]]
          %v1143 = vstv %s1142
          %v1144 = vmul.f32 %v1143, %v290
          %v1145 = vmul.f32 %v1143, %v291
          %v1146 = vmul.f32 %v1143, %v292
          %v1147 = vmul.f32 %v1143, %v293
          %v1148 = vmul.f32 %v1143, %v294
          %v1149 = vmul.f32 %v1143, %v295
          %v1156 = vrot.slane %v1144, 6
          %v1157 = vrot.slane %v1145, 6
          %v1158 = vrot.slane %v1146, 6
          %v1159 = vsel %vm681, %v1156, %v1158
          %v1160 = vrot.slane %v1147, 6
          %v1161 = vsel %vm681, %v1157, %v1160
          %v1162 = vrot.slane %v1148, 6
          %v1163 = vsel %vm681, %v1158, %v1162
          %v1164 = vrot.slane %v1149, 6
          %v1165 = vsel %vm681, %v1160, %v1164
          %v1172 = vadd.f32 %v1136, %v1156
          %v1173 = vadd.f32 %v1137, %v1157
          %v1174 = vadd.f32 %v1138, %v1159
          %v1175 = vadd.f32 %v1139, %v1161
          %v1176 = vadd.f32 %v1140, %v1163
          %v1177 = vadd.f32 %v1141, %v1165
          %s1178 = sld [smem:[#allocation6 + $0x2]]
          %v1179 = vstv %s1178
          %v1180 = vmul.f32 %v1179, %v280
          %v1181 = vmul.f32 %v1179, %v281
          %v1182 = vmul.f32 %v1179, %v282
          %v1183 = vmul.f32 %v1179, %v283
          %v1184 = vmul.f32 %v1179, %v284
          %v1185 = vmul.f32 %v1179, %v285
          %s1186 = sld [smem:[#allocation6 + $0x33]]
          %v1187 = vstv %s1186
          %v1188 = vmul.f32 %v1187, %v288
          %v1189 = vmul.f32 %v1187, %v289
          %v1190 = vmul.f32 %v1187, %v290
          %v1191 = vmul.f32 %v1187, %v291
          %v1192 = vmul.f32 %v1187, %v292
          %v1193 = vmul.f32 %v1187, %v293
          %v1194 = vadd.f32 %v1180, %v1188
          %v1195 = vadd.f32 %v1181, %v1189
          %v1196 = vadd.f32 %v1182, %v1190
          %v1197 = vadd.f32 %v1183, %v1191
          %v1198 = vadd.f32 %v1184, %v1192
          %v1199 = vadd.f32 %v1185, %v1193
          %s1200 = sld [smem:[#allocation6 + $0x9]]
          %v1201 = vstv %s1200
          %v1202 = vmul.f32 %v1201, %v280
          %v1203 = vmul.f32 %v1201, %v281
          %v1204 = vmul.f32 %v1201, %v282
          %v1205 = vmul.f32 %v1201, %v283
          %v1206 = vmul.f32 %v1201, %v284
          %v1207 = vmul.f32 %v1201, %v285
          %v1214 = vrot.slane %v1202, 1
          %v1215 = vrot.slane %v1204, 1
          %v1216 = vsel %vm332, %v1214, %v1215
          %v1217 = vrot.slane %v1203, 1
          %v1218 = vrot.slane %v1205, 1
          %v1219 = vsel %vm332, %v1217, %v1218
          %v1220 = vrot.slane %v1206, 1
          %v1221 = vsel %vm332, %v1215, %v1220
          %v1222 = vrot.slane %v1207, 1
          %v1223 = vsel %vm332, %v1218, %v1222
          %v1230 = vadd.f32 %v1194, %v1216
          %v1231 = vadd.f32 %v1195, %v1219
          %v1232 = vadd.f32 %v1196, %v1221
          %v1233 = vadd.f32 %v1197, %v1223
          %v1234 = vadd.f32 %v1198, %v1220
          %v1235 = vadd.f32 %v1199, %v1222
          %s1236 = sld [smem:[#allocation6 + $0x3a]]
          %v1237 = vstv %s1236
          %v1238 = vmul.f32 %v1237, %v288
          %v1239 = vmul.f32 %v1237, %v289
          %v1240 = vmul.f32 %v1237, %v290
          %v1241 = vmul.f32 %v1237, %v291
          %v1242 = vmul.f32 %v1237, %v292
          %v1243 = vmul.f32 %v1237, %v293
          %v1250 = vrot.slane %v1238, 1
          %v1251 = vrot.slane %v1240, 1
          %v1252 = vsel %vm332, %v1250, %v1251
          %v1253 = vrot.slane %v1239, 1
          %v1254 = vrot.slane %v1241, 1
          %v1255 = vsel %vm332, %v1253, %v1254
          %v1256 = vrot.slane %v1242, 1
          %v1257 = vsel %vm332, %v1251, %v1256
          %v1258 = vrot.slane %v1243, 1
          %v1259 = vsel %vm332, %v1254, %v1258
          %v1266 = vadd.f32 %v1230, %v1252
          %v1267 = vadd.f32 %v1231, %v1255
          %v1268 = vadd.f32 %v1232, %v1257
          %v1269 = vadd.f32 %v1233, %v1259
          %v1270 = vadd.f32 %v1234, %v1256
          %v1271 = vadd.f32 %v1235, %v1258
          %s1272 = sld [smem:[#allocation6 + $0x10]]
          %v1273 = vstv %s1272
          %v1274 = vmul.f32 %v1273, %v280
          %v1275 = vmul.f32 %v1273, %v281
          %v1276 = vmul.f32 %v1273, %v282
          %v1277 = vmul.f32 %v1273, %v283
          %v1278 = vmul.f32 %v1273, %v284
          %v1279 = vmul.f32 %v1273, %v285
          %v1286 = vrot.slane %v1274, 2
          %v1287 = vrot.slane %v1276, 2
          %v1288 = vsel %vm405, %v1286, %v1287
          %v1289 = vrot.slane %v1275, 2
          %v1290 = vrot.slane %v1277, 2
          %v1291 = vsel %vm405, %v1289, %v1290
          %v1292 = vrot.slane %v1278, 2
          %v1293 = vsel %vm405, %v1287, %v1292
          %v1294 = vrot.slane %v1279, 2
          %v1295 = vsel %vm405, %v1290, %v1294
          %v1302 = vadd.f32 %v1266, %v1288
          %v1303 = vadd.f32 %v1267, %v1291
          %v1304 = vadd.f32 %v1268, %v1293
          %v1305 = vadd.f32 %v1269, %v1295
          %v1306 = vadd.f32 %v1270, %v1292
          %v1307 = vadd.f32 %v1271, %v1294
          %s1308 = sld [smem:[#allocation6 + $0x41]]
          %v1309 = vstv %s1308
          %v1310 = vmul.f32 %v1309, %v288
          %v1311 = vmul.f32 %v1309, %v289
          %v1312 = vmul.f32 %v1309, %v290
          %v1313 = vmul.f32 %v1309, %v291
          %v1314 = vmul.f32 %v1309, %v292
          %v1315 = vmul.f32 %v1309, %v293
          %v1322 = vrot.slane %v1310, 2
          %v1323 = vrot.slane %v1312, 2
          %v1324 = vsel %vm405, %v1322, %v1323
          %v1325 = vrot.slane %v1311, 2
          %v1326 = vrot.slane %v1313, 2
          %v1327 = vsel %vm405, %v1325, %v1326
          %v1328 = vrot.slane %v1314, 2
          %v1329 = vsel %vm405, %v1323, %v1328
          %v1330 = vrot.slane %v1315, 2
          %v1331 = vsel %vm405, %v1326, %v1330
          %v1338 = vadd.f32 %v1302, %v1324
          %v1339 = vadd.f32 %v1303, %v1327
          %v1340 = vadd.f32 %v1304, %v1329
          %v1341 = vadd.f32 %v1305, %v1331
          %v1342 = vadd.f32 %v1306, %v1328
          %v1343 = vadd.f32 %v1307, %v1330
          %s1344 = sld [smem:[#allocation6 + $0x17]]
          %v1345 = vstv %s1344
          %v1346 = vmul.f32 %v1345, %v282
          %v1347 = vmul.f32 %v1345, %v283
          %v1348 = vmul.f32 %v1345, %v284
          %v1349 = vmul.f32 %v1345, %v285
          %v1354 = vrot.slane %v1346, 3
          %v1355 = vrot.slane %v1347, 3
          %v1356 = vrot.slane %v1348, 3
          %v1357 = vsel %vm474, %v1354, %v1356
          %v1358 = vrot.slane %v1349, 3
          %v1359 = vsel %vm474, %v1355, %v1358
          %v1366 = vadd.f32 %v1338, %v1354
          %v1367 = vadd.f32 %v1339, %v1355
          %v1368 = vadd.f32 %v1340, %v1357
          %v1369 = vadd.f32 %v1341, %v1359
          %v1370 = vadd.f32 %v1342, %v1356
          %v1371 = vadd.f32 %v1343, %v1358
          %s1372 = sld [smem:[#allocation6 + $0x48]]
          %v1373 = vstv %s1372
          %v1374 = vmul.f32 %v1373, %v290
          %v1375 = vmul.f32 %v1373, %v291
          %v1376 = vmul.f32 %v1373, %v292
          %v1377 = vmul.f32 %v1373, %v293
          %v1382 = vrot.slane %v1374, 3
          %v1383 = vrot.slane %v1375, 3
          %v1384 = vrot.slane %v1376, 3
          %v1385 = vsel %vm474, %v1382, %v1384
          %v1386 = vrot.slane %v1377, 3
          %v1387 = vsel %vm474, %v1383, %v1386
          %v1394 = vadd.f32 %v1366, %v1382
          %v1395 = vadd.f32 %v1367, %v1383
          %v1396 = vadd.f32 %v1368, %v1385
          %v1397 = vadd.f32 %v1369, %v1387
          %v1398 = vadd.f32 %v1370, %v1384
          %v1399 = vadd.f32 %v1371, %v1386
          %s1400 = sld [smem:[#allocation6 + $0x1e]]
          %v1401 = vstv %s1400
          %v1402 = vmul.f32 %v1401, %v282
          %v1403 = vmul.f32 %v1401, %v283
          %v1404 = vmul.f32 %v1401, %v284
          %v1405 = vmul.f32 %v1401, %v285
          %v1406 = vmul.f32 %v1401, %v286
          %v1407 = vmul.f32 %v1401, %v287
          %v1414 = vrot.slane %v1402, 4
          %v1415 = vrot.slane %v1403, 4
          %v1416 = vrot.slane %v1404, 4
          %v1417 = vsel %vm535, %v1414, %v1416
          %v1418 = vrot.slane %v1405, 4
          %v1419 = vsel %vm535, %v1415, %v1418
          %v1420 = vrot.slane %v1406, 4
          %v1421 = vsel %vm535, %v1416, %v1420
          %v1422 = vrot.slane %v1407, 4
          %v1423 = vsel %vm535, %v1418, %v1422
          %v1430 = vadd.f32 %v1394, %v1414
          %v1431 = vadd.f32 %v1395, %v1415
          %v1432 = vadd.f32 %v1396, %v1417
          %v1433 = vadd.f32 %v1397, %v1419
          %v1434 = vadd.f32 %v1398, %v1421
          %v1435 = vadd.f32 %v1399, %v1423
          %s1436 = sld [smem:[#allocation6 + $0x4f]]
          %v1437 = vstv %s1436
          %v1438 = vmul.f32 %v1437, %v290
          %v1439 = vmul.f32 %v1437, %v291
          %v1440 = vmul.f32 %v1437, %v292
          %v1441 = vmul.f32 %v1437, %v293
          %v1442 = vmul.f32 %v1437, %v294
          %v1443 = vmul.f32 %v1437, %v295
          %v1450 = vrot.slane %v1438, 4
          %v1451 = vrot.slane %v1439, 4
          %v1452 = vrot.slane %v1440, 4
          %v1453 = vsel %vm535, %v1450, %v1452
          %v1454 = vrot.slane %v1441, 4
          %v1455 = vsel %vm535, %v1451, %v1454
          %v1456 = vrot.slane %v1442, 4
          %v1457 = vsel %vm535, %v1452, %v1456
          %v1458 = vrot.slane %v1443, 4
          %v1459 = vsel %vm535, %v1454, %v1458
          %v1466 = vadd.f32 %v1430, %v1450
          %v1467 = vadd.f32 %v1431, %v1451
          %v1468 = vadd.f32 %v1432, %v1453
          %v1469 = vadd.f32 %v1433, %v1455
          %v1470 = vadd.f32 %v1434, %v1457
          %v1471 = vadd.f32 %v1435, %v1459
          %s1472 = sld [smem:[#allocation6 + $0x25]]
          %v1473 = vstv %s1472
          %v1474 = vmul.f32 %v1473, %v282
          %v1475 = vmul.f32 %v1473, %v283
          %v1476 = vmul.f32 %v1473, %v284
          %v1477 = vmul.f32 %v1473, %v285
          %v1478 = vmul.f32 %v1473, %v286
          %v1479 = vmul.f32 %v1473, %v287
          %v1486 = vrot.slane %v1474, 5
          %v1487 = vrot.slane %v1475, 5
          %v1488 = vrot.slane %v1476, 5
          %v1489 = vsel %vm608, %v1486, %v1488
          %v1490 = vrot.slane %v1477, 5
          %v1491 = vsel %vm608, %v1487, %v1490
          %v1492 = vrot.slane %v1478, 5
          %v1493 = vsel %vm608, %v1488, %v1492
          %v1494 = vrot.slane %v1479, 5
          %v1495 = vsel %vm608, %v1490, %v1494
          %v1502 = vadd.f32 %v1466, %v1486
          %v1503 = vadd.f32 %v1467, %v1487
          %v1504 = vadd.f32 %v1468, %v1489
          %v1505 = vadd.f32 %v1469, %v1491
          %v1506 = vadd.f32 %v1470, %v1493
          %v1507 = vadd.f32 %v1471, %v1495
          %s1508 = sld [smem:[#allocation6 + $0x56]]
          %v1509 = vstv %s1508
          %v1510 = vmul.f32 %v1509, %v290
          %v1511 = vmul.f32 %v1509, %v291
          %v1512 = vmul.f32 %v1509, %v292
          %v1513 = vmul.f32 %v1509, %v293
          %v1514 = vmul.f32 %v1509, %v294
          %v1515 = vmul.f32 %v1509, %v295
          %v1522 = vrot.slane %v1510, 5
          %v1523 = vrot.slane %v1511, 5
          %v1524 = vrot.slane %v1512, 5
          %v1525 = vsel %vm608, %v1522, %v1524
          %v1526 = vrot.slane %v1513, 5
          %v1527 = vsel %vm608, %v1523, %v1526
          %v1528 = vrot.slane %v1514, 5
          %v1529 = vsel %vm608, %v1524, %v1528
          %v1530 = vrot.slane %v1515, 5
          %v1531 = vsel %vm608, %v1526, %v1530
          %v1538 = vadd.f32 %v1502, %v1522
          %v1539 = vadd.f32 %v1503, %v1523
          %v1540 = vadd.f32 %v1504, %v1525
          %v1541 = vadd.f32 %v1505, %v1527
          %v1542 = vadd.f32 %v1506, %v1529
          %v1543 = vadd.f32 %v1507, %v1531
          %s1544 = sld [smem:[#allocation6 + $0x2c]]
          %v1545 = vstv %s1544
          %v1546 = vmul.f32 %v1545, %v282
          %v1547 = vmul.f32 %v1545, %v283
          %v1548 = vmul.f32 %v1545, %v284
          %v1549 = vmul.f32 %v1545, %v285
          %v1550 = vmul.f32 %v1545, %v286
          %v1551 = vmul.f32 %v1545, %v287
          %v1558 = vrot.slane %v1546, 6
          %v1559 = vrot.slane %v1547, 6
          %v1560 = vrot.slane %v1548, 6
          %v1561 = vsel %vm681, %v1558, %v1560
          %v1562 = vrot.slane %v1549, 6
          %v1563 = vsel %vm681, %v1559, %v1562
          %v1564 = vrot.slane %v1550, 6
          %v1565 = vsel %vm681, %v1560, %v1564
          %v1566 = vrot.slane %v1551, 6
          %v1567 = vsel %vm681, %v1562, %v1566
          %v1574 = vadd.f32 %v1538, %v1558
          %v1575 = vadd.f32 %v1539, %v1559
          %v1576 = vadd.f32 %v1540, %v1561
          %v1577 = vadd.f32 %v1541, %v1563
          %v1578 = vadd.f32 %v1542, %v1565
          %v1579 = vadd.f32 %v1543, %v1567
          %s1580 = sld [smem:[#allocation6 + $0x5d]]
          %v1581 = vstv %s1580
          %v1582 = vmul.f32 %v1581, %v290
          %v1583 = vmul.f32 %v1581, %v291
          %v1584 = vmul.f32 %v1581, %v292
          %v1585 = vmul.f32 %v1581, %v293
          %v1586 = vmul.f32 %v1581, %v294
          %v1587 = vmul.f32 %v1581, %v295
          %v1594 = vrot.slane %v1582, 6
          %v1595 = vrot.slane %v1583, 6
          %v1596 = vrot.slane %v1584, 6
          %v1597 = vsel %vm681, %v1594, %v1596
          %v1598 = vrot.slane %v1585, 6
          %v1599 = vsel %vm681, %v1595, %v1598
          %v1600 = vrot.slane %v1586, 6
          %v1601 = vsel %vm681, %v1596, %v1600
          %v1602 = vrot.slane %v1587, 6
          %v1603 = vsel %vm681, %v1598, %v1602
          %v1610 = vadd.f32 %v1574, %v1594
          %v1611 = vadd.f32 %v1575, %v1595
          %v1612 = vadd.f32 %v1576, %v1597
          %v1613 = vadd.f32 %v1577, %v1599
          %v1614 = vadd.f32 %v1578, %v1601
          %v1615 = vadd.f32 %v1579, %v1603
          %s1616 = sld [smem:[#allocation6 + $0x3]]
          %v1617 = vstv %s1616
          %v1618 = vmul.f32 %v1617, %v281
          %v1619 = vmul.f32 %v1617, %v283
          %v1620 = vmul.f32 %v1617, %v285
          %s1621 = sld [smem:[#allocation6 + $0x34]]
          %v1622 = vstv %s1621
          %v1623 = vmul.f32 %v1622, %v289
          %v1624 = vmul.f32 %v1622, %v291
          %v1625 = vmul.f32 %v1622, %v293
          %v1626 = vadd.f32 %v1618, %v1623
          %v1627 = vadd.f32 %v1619, %v1624
          %v1628 = vadd.f32 %v1620, %v1625
          %s1629 = sld [smem:[#allocation6 + $0xa]]
          %v1630 = vstv %s1629
          %v1631 = vmul.f32 %v1630, %v281
          %v1632 = vmul.f32 %v1630, %v283
          %v1633 = vmul.f32 %v1630, %v285
          %v1637 = vrot.slane %v1631, 1
          %v1638 = vrot.slane %v1632, 1
          %v1639 = vsel %vm332, %v1637, %v1638
          %v1640 = vrot.slane %v1633, 1
          %v1641 = vsel %vm332, %v1638, %v1640
          %v1645 = vadd.f32 %v1626, %v1639
          %v1646 = vadd.f32 %v1627, %v1641
          %v1647 = vadd.f32 %v1628, %v1640
          %s1648 = sld [smem:[#allocation6 + $0x3b]]
          %v1649 = vstv %s1648
          %v1650 = vmul.f32 %v1649, %v289
          %v1651 = vmul.f32 %v1649, %v291
          %v1652 = vmul.f32 %v1649, %v293
          %v1656 = vrot.slane %v1650, 1
          %v1657 = vrot.slane %v1651, 1
          %v1658 = vsel %vm332, %v1656, %v1657
          %v1659 = vrot.slane %v1652, 1
          %v1660 = vsel %vm332, %v1657, %v1659
          %v1664 = vadd.f32 %v1645, %v1658
          %v1665 = vadd.f32 %v1646, %v1660
          %v1666 = vadd.f32 %v1647, %v1659
          %s1667 = sld [smem:[#allocation6 + $0x11]]
          %v1668 = vstv %s1667
          %v1669 = vmul.f32 %v1668, %v281
          %v1670 = vmul.f32 %v1668, %v283
          %v1671 = vmul.f32 %v1668, %v285
          %v1675 = vrot.slane %v1669, 2
          %v1676 = vrot.slane %v1670, 2
          %v1677 = vsel %vm405, %v1675, %v1676
          %v1678 = vrot.slane %v1671, 2
          %v1679 = vsel %vm405, %v1676, %v1678
          %v1683 = vadd.f32 %v1664, %v1677
          %v1684 = vadd.f32 %v1665, %v1679
          %v1685 = vadd.f32 %v1666, %v1678
          %s1686 = sld [smem:[#allocation6 + $0x42]]
          %v1687 = vstv %s1686
          %v1688 = vmul.f32 %v1687, %v289
          %v1689 = vmul.f32 %v1687, %v291
          %v1690 = vmul.f32 %v1687, %v293
          %v1694 = vrot.slane %v1688, 2
          %v1695 = vrot.slane %v1689, 2
          %v1696 = vsel %vm405, %v1694, %v1695
          %v1697 = vrot.slane %v1690, 2
          %v1698 = vsel %vm405, %v1695, %v1697
          %v1702 = vadd.f32 %v1683, %v1696
          %v1703 = vadd.f32 %v1684, %v1698
          %v1704 = vadd.f32 %v1685, %v1697
          %s1705 = sld [smem:[#allocation6 + $0x18]]
          %v1706 = vstv %s1705
          %v1707 = vmul.f32 %v1706, %v283
          %v1708 = vmul.f32 %v1706, %v285
          %v1711 = vrot.slane %v1707, 3
          %v1712 = vrot.slane %v1708, 3
          %v1713 = vsel %vm474, %v1711, %v1712
          %v1717 = vadd.f32 %v1702, %v1711
          %v1718 = vadd.f32 %v1703, %v1713
          %v1719 = vadd.f32 %v1704, %v1712
          %s1720 = sld [smem:[#allocation6 + $0x49]]
          %v1721 = vstv %s1720
          %v1722 = vmul.f32 %v1721, %v291
          %v1723 = vmul.f32 %v1721, %v293
          %v1726 = vrot.slane %v1722, 3
          %v1727 = vrot.slane %v1723, 3
          %v1728 = vsel %vm474, %v1726, %v1727
          %v1732 = vadd.f32 %v1717, %v1726
          %v1733 = vadd.f32 %v1718, %v1728
          %v1734 = vadd.f32 %v1719, %v1727
          %s1735 = sld [smem:[#allocation6 + $0x1f]]
          %v1736 = vstv %s1735
          %v1737 = vmul.f32 %v1736, %v283
          %v1738 = vmul.f32 %v1736, %v285
          %v1739 = vmul.f32 %v1736, %v287
          %v1743 = vrot.slane %v1737, 4
          %v1744 = vrot.slane %v1738, 4
          %v1745 = vsel %vm535, %v1743, %v1744
          %v1746 = vrot.slane %v1739, 4
          %v1747 = vsel %vm535, %v1744, %v1746
          %v1751 = vadd.f32 %v1732, %v1743
          %v1752 = vadd.f32 %v1733, %v1745
          %v1753 = vadd.f32 %v1734, %v1747
          %s1754 = sld [smem:[#allocation6 + $0x50]]
          %v1755 = vstv %s1754
          %v1756 = vmul.f32 %v1755, %v291
          %v1757 = vmul.f32 %v1755, %v293
          %v1758 = vmul.f32 %v1755, %v295
          %v1762 = vrot.slane %v1756, 4
          %v1763 = vrot.slane %v1757, 4
          %v1764 = vsel %vm535, %v1762, %v1763
          %v1765 = vrot.slane %v1758, 4
          %v1766 = vsel %vm535, %v1763, %v1765
          %v1770 = vadd.f32 %v1751, %v1762
          %v1771 = vadd.f32 %v1752, %v1764
          %v1772 = vadd.f32 %v1753, %v1766
          %s1773 = sld [smem:[#allocation6 + $0x26]]
          %v1774 = vstv %s1773
          %v1775 = vmul.f32 %v1774, %v283
          %v1776 = vmul.f32 %v1774, %v285
          %v1777 = vmul.f32 %v1774, %v287
          %v1781 = vrot.slane %v1775, 5
          %v1782 = vrot.slane %v1776, 5
          %v1783 = vsel %vm608, %v1781, %v1782
          %v1784 = vrot.slane %v1777, 5
          %v1785 = vsel %vm608, %v1782, %v1784
          %v1789 = vadd.f32 %v1770, %v1781
          %v1790 = vadd.f32 %v1771, %v1783
          %v1791 = vadd.f32 %v1772, %v1785
          %s1792 = sld [smem:[#allocation6 + $0x57]]
          %v1793 = vstv %s1792
          %v1794 = vmul.f32 %v1793, %v291
          %v1795 = vmul.f32 %v1793, %v293
          %v1796 = vmul.f32 %v1793, %v295
          %v1800 = vrot.slane %v1794, 5
          %v1801 = vrot.slane %v1795, 5
          %v1802 = vsel %vm608, %v1800, %v1801
          %v1803 = vrot.slane %v1796, 5
          %v1804 = vsel %vm608, %v1801, %v1803
          %v1808 = vadd.f32 %v1789, %v1800
          %v1809 = vadd.f32 %v1790, %v1802
          %v1810 = vadd.f32 %v1791, %v1804
          %s1811 = sld [smem:[#allocation6 + $0x2d]]
          %v1812 = vstv %s1811
          %v1813 = vmul.f32 %v1812, %v283
          %v1814 = vmul.f32 %v1812, %v285
          %v1815 = vmul.f32 %v1812, %v287
          %v1819 = vrot.slane %v1813, 6
          %v1820 = vrot.slane %v1814, 6
          %v1821 = vsel %vm681, %v1819, %v1820
          %v1822 = vrot.slane %v1815, 6
          %v1823 = vsel %vm681, %v1820, %v1822
          %v1827 = vadd.f32 %v1808, %v1819
          %v1828 = vadd.f32 %v1809, %v1821
          %v1829 = vadd.f32 %v1810, %v1823
          %s1830 = sld [smem:[#allocation6 + $0x5e]]
          %v1831 = vstv %s1830
          %v1832 = vmul.f32 %v1831, %v291
          %v1833 = vmul.f32 %v1831, %v293
          %v1834 = vmul.f32 %v1831, %v295
          %v1838 = vrot.slane %v1832, 6
          %v1839 = vrot.slane %v1833, 6
          %v1840 = vsel %vm681, %v1838, %v1839
          %v1841 = vrot.slane %v1834, 6
          %v1842 = vsel %vm681, %v1839, %v1841
          %v1846 = vadd.f32 %v1827, %v1838
          %v1847 = vadd.f32 %v1828, %v1840
          %v1848 = vadd.f32 %v1829, %v1842
          %s1849 = sld [smem:[#allocation6 + $0x4]]
          %v1850 = vstv %s1849
          %v1851 = vmul.f32 %v1850, %v281
          %v1852 = vmul.f32 %v1850, %v283
          %v1853 = vmul.f32 %v1850, %v285
          %s1854 = sld [smem:[#allocation6 + $0x35]]
          %v1855 = vstv %s1854
          %v1856 = vmul.f32 %v1855, %v289
          %v1857 = vmul.f32 %v1855, %v291
          %v1858 = vmul.f32 %v1855, %v293
          %v1859 = vadd.f32 %v1851, %v1856
          %v1860 = vadd.f32 %v1852, %v1857
          %v1861 = vadd.f32 %v1853, %v1858
          %s1862 = sld [smem:[#allocation6 + $0xb]]
          %v1863 = vstv %s1862
          %v1864 = vmul.f32 %v1863, %v281
          %v1865 = vmul.f32 %v1863, %v283
          %v1866 = vmul.f32 %v1863, %v285
          %v1870 = vrot.slane %v1864, 1
          %v1871 = vrot.slane %v1865, 1
          %v1872 = vsel %vm332, %v1870, %v1871
          %v1873 = vrot.slane %v1866, 1
          %v1874 = vsel %vm332, %v1871, %v1873
          %v1878 = vadd.f32 %v1859, %v1872
          %v1879 = vadd.f32 %v1860, %v1874
          %v1880 = vadd.f32 %v1861, %v1873
          %s1881 = sld [smem:[#allocation6 + $0x3c]]
          %v1882 = vstv %s1881
          %v1883 = vmul.f32 %v1882, %v289
          %v1884 = vmul.f32 %v1882, %v291
          %v1885 = vmul.f32 %v1882, %v293
          %v1889 = vrot.slane %v1883, 1
          %v1890 = vrot.slane %v1884, 1
          %v1891 = vsel %vm332, %v1889, %v1890
          %v1892 = vrot.slane %v1885, 1
          %v1893 = vsel %vm332, %v1890, %v1892
          %v1897 = vadd.f32 %v1878, %v1891
          %v1898 = vadd.f32 %v1879, %v1893
          %v1899 = vadd.f32 %v1880, %v1892
          %s1900 = sld [smem:[#allocation6 + $0x12]]
          %v1901 = vstv %s1900
          %v1902 = vmul.f32 %v1901, %v281
          %v1903 = vmul.f32 %v1901, %v283
          %v1904 = vmul.f32 %v1901, %v285
          %v1908 = vrot.slane %v1902, 2
          %v1909 = vrot.slane %v1903, 2
          %v1910 = vsel %vm405, %v1908, %v1909
          %v1911 = vrot.slane %v1904, 2
          %v1912 = vsel %vm405, %v1909, %v1911
          %v1916 = vadd.f32 %v1897, %v1910
          %v1917 = vadd.f32 %v1898, %v1912
          %v1918 = vadd.f32 %v1899, %v1911
          %s1919 = sld [smem:[#allocation6 + $0x43]]
          %v1920 = vstv %s1919
          %v1921 = vmul.f32 %v1920, %v289
          %v1922 = vmul.f32 %v1920, %v291
          %v1923 = vmul.f32 %v1920, %v293
          %v1927 = vrot.slane %v1921, 2
          %v1928 = vrot.slane %v1922, 2
          %v1929 = vsel %vm405, %v1927, %v1928
          %v1930 = vrot.slane %v1923, 2
          %v1931 = vsel %vm405, %v1928, %v1930
          %v1935 = vadd.f32 %v1916, %v1929
          %v1936 = vadd.f32 %v1917, %v1931
          %v1937 = vadd.f32 %v1918, %v1930
          %s1938 = sld [smem:[#allocation6 + $0x19]]
          %v1939 = vstv %s1938
          %v1940 = vmul.f32 %v1939, %v283
          %v1941 = vmul.f32 %v1939, %v285
          %v1944 = vrot.slane %v1940, 3
          %v1945 = vrot.slane %v1941, 3
          %v1946 = vsel %vm474, %v1944, %v1945
          %v1950 = vadd.f32 %v1935, %v1944
          %v1951 = vadd.f32 %v1936, %v1946
          %v1952 = vadd.f32 %v1937, %v1945
          %s1953 = sld [smem:[#allocation6 + $0x4a]]
          %v1954 = vstv %s1953
          %v1955 = vmul.f32 %v1954, %v291
          %v1956 = vmul.f32 %v1954, %v293
          %v1959 = vrot.slane %v1955, 3
          %v1960 = vrot.slane %v1956, 3
          %v1961 = vsel %vm474, %v1959, %v1960
          %v1965 = vadd.f32 %v1950, %v1959
          %v1966 = vadd.f32 %v1951, %v1961
          %v1967 = vadd.f32 %v1952, %v1960
          %s1968 = sld [smem:[#allocation6 + $0x20]]
          %v1969 = vstv %s1968
          %v1970 = vmul.f32 %v1969, %v283
          %v1971 = vmul.f32 %v1969, %v285
          %v1972 = vmul.f32 %v1969, %v287
          %v1976 = vrot.slane %v1970, 4
          %v1977 = vrot.slane %v1971, 4
          %v1978 = vsel %vm535, %v1976, %v1977
          %v1979 = vrot.slane %v1972, 4
          %v1980 = vsel %vm535, %v1977, %v1979
          %v1984 = vadd.f32 %v1965, %v1976
          %v1985 = vadd.f32 %v1966, %v1978
          %v1986 = vadd.f32 %v1967, %v1980
          %s1987 = sld [smem:[#allocation6 + $0x51]]
          %v1988 = vstv %s1987
          %v1989 = vmul.f32 %v1988, %v291
          %v1990 = vmul.f32 %v1988, %v293
          %v1991 = vmul.f32 %v1988, %v295
          %v1995 = vrot.slane %v1989, 4
          %v1996 = vrot.slane %v1990, 4
          %v1997 = vsel %vm535, %v1995, %v1996
          %v1998 = vrot.slane %v1991, 4
          %v1999 = vsel %vm535, %v1996, %v1998
          %v2003 = vadd.f32 %v1984, %v1995
          %v2004 = vadd.f32 %v1985, %v1997
          %v2005 = vadd.f32 %v1986, %v1999
          %s2006 = sld [smem:[#allocation6 + $0x27]]
          %v2007 = vstv %s2006
          %v2008 = vmul.f32 %v2007, %v283
          %v2009 = vmul.f32 %v2007, %v285
          %v2010 = vmul.f32 %v2007, %v287
          %v2014 = vrot.slane %v2008, 5
          %v2015 = vrot.slane %v2009, 5
          %v2016 = vsel %vm608, %v2014, %v2015
          %v2017 = vrot.slane %v2010, 5
          %v2018 = vsel %vm608, %v2015, %v2017
          %v2022 = vadd.f32 %v2003, %v2014
          %v2023 = vadd.f32 %v2004, %v2016
          %v2024 = vadd.f32 %v2005, %v2018
          %s2025 = sld [smem:[#allocation6 + $0x58]]
          %v2026 = vstv %s2025
          %v2027 = vmul.f32 %v2026, %v291
          %v2028 = vmul.f32 %v2026, %v293
          %v2029 = vmul.f32 %v2026, %v295
          %v2033 = vrot.slane %v2027, 5
          %v2034 = vrot.slane %v2028, 5
          %v2035 = vsel %vm608, %v2033, %v2034
          %v2036 = vrot.slane %v2029, 5
          %v2037 = vsel %vm608, %v2034, %v2036
          %v2041 = vadd.f32 %v2022, %v2033
          %v2042 = vadd.f32 %v2023, %v2035
          %v2043 = vadd.f32 %v2024, %v2037
          %s2044 = sld [smem:[#allocation6 + $0x2e]]
          %v2045 = vstv %s2044
          %v2046 = vmul.f32 %v2045, %v283
          %v2047 = vmul.f32 %v2045, %v285
          %v2048 = vmul.f32 %v2045, %v287
          %v2052 = vrot.slane %v2046, 6
          %v2053 = vrot.slane %v2047, 6
          %v2054 = vsel %vm681, %v2052, %v2053
          %v2055 = vrot.slane %v2048, 6
          %v2056 = vsel %vm681, %v2053, %v2055
          %v2060 = vadd.f32 %v2041, %v2052
          %v2061 = vadd.f32 %v2042, %v2054
          %v2062 = vadd.f32 %v2043, %v2056
          %s2063 = sld [smem:[#allocation6 + $0x5f]]
          %v2064 = vstv %s2063
          %v2065 = vmul.f32 %v2064, %v291
          %v2066 = vmul.f32 %v2064, %v293
          %v2067 = vmul.f32 %v2064, %v295
          %v2071 = vrot.slane %v2065, 6
          %v2072 = vrot.slane %v2066, 6
          %v2073 = vsel %vm681, %v2071, %v2072
          %v2074 = vrot.slane %v2067, 6
          %v2075 = vsel %vm681, %v2072, %v2074
          %v2079 = vadd.f32 %v2060, %v2071
          %v2080 = vadd.f32 %v2061, %v2073
          %v2081 = vadd.f32 %v2062, %v2075
          %s2082 = sld [smem:[#allocation6 + $0x5]]
          %v2083 = vstv %s2082
          %v2084 = vmul.f32 %v2083, %v281
          %v2085 = vmul.f32 %v2083, %v283
          %v2086 = vmul.f32 %v2083, %v285
          %s2087 = sld [smem:[#allocation6 + $0x36]]
          %v2088 = vstv %s2087
          %v2089 = vmul.f32 %v2088, %v289
          %v2090 = vmul.f32 %v2088, %v291
          %v2091 = vmul.f32 %v2088, %v293
          %v2092 = vadd.f32 %v2084, %v2089
          %v2093 = vadd.f32 %v2085, %v2090
          %v2094 = vadd.f32 %v2086, %v2091
          %s2095 = sld [smem:[#allocation6 + $0xc]]
          %v2096 = vstv %s2095
          %v2097 = vmul.f32 %v2096, %v281
          %v2098 = vmul.f32 %v2096, %v283
          %v2099 = vmul.f32 %v2096, %v285
          %v2103 = vrot.slane %v2097, 1
          %v2104 = vrot.slane %v2098, 1
          %v2105 = vsel %vm332, %v2103, %v2104
          %v2106 = vrot.slane %v2099, 1
          %v2107 = vsel %vm332, %v2104, %v2106
          %v2111 = vadd.f32 %v2092, %v2105
          %v2112 = vadd.f32 %v2093, %v2107
          %v2113 = vadd.f32 %v2094, %v2106
          %s2114 = sld [smem:[#allocation6 + $0x3d]]
          %v2115 = vstv %s2114
          %v2116 = vmul.f32 %v2115, %v289
          %v2117 = vmul.f32 %v2115, %v291
          %v2118 = vmul.f32 %v2115, %v293
          %v2122 = vrot.slane %v2116, 1
          %v2123 = vrot.slane %v2117, 1
          %v2124 = vsel %vm332, %v2122, %v2123
          %v2125 = vrot.slane %v2118, 1
          %v2126 = vsel %vm332, %v2123, %v2125
          %v2130 = vadd.f32 %v2111, %v2124
          %v2131 = vadd.f32 %v2112, %v2126
          %v2132 = vadd.f32 %v2113, %v2125
          %s2133 = sld [smem:[#allocation6 + $0x13]]
          %v2134 = vstv %s2133
          %v2135 = vmul.f32 %v2134, %v281
          %v2136 = vmul.f32 %v2134, %v283
          %v2137 = vmul.f32 %v2134, %v285
          %v2141 = vrot.slane %v2135, 2
          %v2142 = vrot.slane %v2136, 2
          %v2143 = vsel %vm405, %v2141, %v2142
          %v2144 = vrot.slane %v2137, 2
          %v2145 = vsel %vm405, %v2142, %v2144
          %v2149 = vadd.f32 %v2130, %v2143
          %v2150 = vadd.f32 %v2131, %v2145
          %v2151 = vadd.f32 %v2132, %v2144
          %s2152 = sld [smem:[#allocation6 + $0x44]]
          %v2153 = vstv %s2152
          %v2154 = vmul.f32 %v2153, %v289
          %v2155 = vmul.f32 %v2153, %v291
          %v2156 = vmul.f32 %v2153, %v293
          %v2160 = vrot.slane %v2154, 2
          %v2161 = vrot.slane %v2155, 2
          %v2162 = vsel %vm405, %v2160, %v2161
          %v2163 = vrot.slane %v2156, 2
          %v2164 = vsel %vm405, %v2161, %v2163
          %v2168 = vadd.f32 %v2149, %v2162
          %v2169 = vadd.f32 %v2150, %v2164
          %v2170 = vadd.f32 %v2151, %v2163
          %s2171 = sld [smem:[#allocation6 + $0x1a]]
          %v2172 = vstv %s2171
          %v2173 = vmul.f32 %v2172, %v283
          %v2174 = vmul.f32 %v2172, %v285
          %v2177 = vrot.slane %v2173, 3
          %v2178 = vrot.slane %v2174, 3
          %v2179 = vsel %vm474, %v2177, %v2178
          %v2183 = vadd.f32 %v2168, %v2177
          %v2184 = vadd.f32 %v2169, %v2179
          %v2185 = vadd.f32 %v2170, %v2178
          %s2186 = sld [smem:[#allocation6 + $0x4b]]
          %v2187 = vstv %s2186
          %v2188 = vmul.f32 %v2187, %v291
          %v2189 = vmul.f32 %v2187, %v293
          %v2192 = vrot.slane %v2188, 3
          %v2193 = vrot.slane %v2189, 3
          %v2194 = vsel %vm474, %v2192, %v2193
          %v2198 = vadd.f32 %v2183, %v2192
          %v2199 = vadd.f32 %v2184, %v2194
          %v2200 = vadd.f32 %v2185, %v2193
          %s2201 = sld [smem:[#allocation6 + $0x21]]
          %v2202 = vstv %s2201
          %v2203 = vmul.f32 %v2202, %v283
          %v2204 = vmul.f32 %v2202, %v285
          %v2205 = vmul.f32 %v2202, %v287
          %v2209 = vrot.slane %v2203, 4
          %v2210 = vrot.slane %v2204, 4
          %v2211 = vsel %vm535, %v2209, %v2210
          %v2212 = vrot.slane %v2205, 4
          %v2213 = vsel %vm535, %v2210, %v2212
          %v2217 = vadd.f32 %v2198, %v2209
          %v2218 = vadd.f32 %v2199, %v2211
          %v2219 = vadd.f32 %v2200, %v2213
          %s2220 = sld [smem:[#allocation6 + $0x52]]
          %v2221 = vstv %s2220
          %v2222 = vmul.f32 %v2221, %v291
          %v2223 = vmul.f32 %v2221, %v293
          %v2224 = vmul.f32 %v2221, %v295
          %v2228 = vrot.slane %v2222, 4
          %v2229 = vrot.slane %v2223, 4
          %v2230 = vsel %vm535, %v2228, %v2229
          %v2231 = vrot.slane %v2224, 4
          %v2232 = vsel %vm535, %v2229, %v2231
          %v2236 = vadd.f32 %v2217, %v2228
          %v2237 = vadd.f32 %v2218, %v2230
          %v2238 = vadd.f32 %v2219, %v2232
          %s2239 = sld [smem:[#allocation6 + $0x28]]
          %v2240 = vstv %s2239
          %v2241 = vmul.f32 %v2240, %v283
          %v2242 = vmul.f32 %v2240, %v285
          %v2243 = vmul.f32 %v2240, %v287
          %v2247 = vrot.slane %v2241, 5
          %v2248 = vrot.slane %v2242, 5
          %v2249 = vsel %vm608, %v2247, %v2248
          %v2250 = vrot.slane %v2243, 5
          %v2251 = vsel %vm608, %v2248, %v2250
          %v2255 = vadd.f32 %v2236, %v2247
          %v2256 = vadd.f32 %v2237, %v2249
          %v2257 = vadd.f32 %v2238, %v2251
          %s2258 = sld [smem:[#allocation6 + $0x59]]
          %v2259 = vstv %s2258
          %v2260 = vmul.f32 %v2259, %v291
          %v2261 = vmul.f32 %v2259, %v293
          %v2262 = vmul.f32 %v2259, %v295
          %v2266 = vrot.slane %v2260, 5
          %v2267 = vrot.slane %v2261, 5
          %v2268 = vsel %vm608, %v2266, %v2267
          %v2269 = vrot.slane %v2262, 5
          %v2270 = vsel %vm608, %v2267, %v2269
          %v2274 = vadd.f32 %v2255, %v2266
          %v2275 = vadd.f32 %v2256, %v2268
          %v2276 = vadd.f32 %v2257, %v2270
          %s2277 = sld [smem:[#allocation6 + $0x2f]]
          %v2278 = vstv %s2277
          %v2279 = vmul.f32 %v2278, %v283
          %v2280 = vmul.f32 %v2278, %v285
          %v2281 = vmul.f32 %v2278, %v287
          %v2285 = vrot.slane %v2279, 6
          %v2286 = vrot.slane %v2280, 6
          %v2287 = vsel %vm681, %v2285, %v2286
          %v2288 = vrot.slane %v2281, 6
          %v2289 = vsel %vm681, %v2286, %v2288
          %v2293 = vadd.f32 %v2274, %v2285
          %v2294 = vadd.f32 %v2275, %v2287
          %v2295 = vadd.f32 %v2276, %v2289
          %s2296 = sld [smem:[#allocation6 + $0x60]]
          %v2297 = vstv %s2296
          %v2298 = vmul.f32 %v2297, %v291
          %v2299 = vmul.f32 %v2297, %v293
          %v2300 = vmul.f32 %v2297, %v295
          %v2304 = vrot.slane %v2298, 6
          %v2305 = vrot.slane %v2299, 6
          %v2306 = vsel %vm681, %v2304, %v2305
          %v2307 = vrot.slane %v2300, 6
          %v2308 = vsel %vm681, %v2305, %v2307
          %v2312 = vadd.f32 %v2293, %v2304
          %v2313 = vadd.f32 %v2294, %v2306
          %v2314 = vadd.f32 %v2295, %v2308
          %s2315 = sld [smem:[#allocation6 + $0x6]]
          %v2316 = vstv %s2315
          %v2317 = vmul.f32 %v2316, %v281
          %v2318 = vmul.f32 %v2316, %v283
          %v2319 = vmul.f32 %v2316, %v285
          %s2320 = sld [smem:[#allocation6 + $0x37]]
          %v2321 = vstv %s2320
          %v2322 = vmul.f32 %v2321, %v289
          %v2323 = vmul.f32 %v2321, %v291
          %v2324 = vmul.f32 %v2321, %v293
          %v2325 = vadd.f32 %v2317, %v2322
          %v2326 = vadd.f32 %v2318, %v2323
          %v2327 = vadd.f32 %v2319, %v2324
          %s2328 = sld [smem:[#allocation6 + $0xd]]
          %v2329 = vstv %s2328
          %v2330 = vmul.f32 %v2329, %v281
          %v2331 = vmul.f32 %v2329, %v283
          %v2332 = vmul.f32 %v2329, %v285
          %v2336 = vrot.slane %v2330, 1
          %v2337 = vrot.slane %v2331, 1
          %v2338 = vsel %vm332, %v2336, %v2337
          %v2339 = vrot.slane %v2332, 1
          %v2340 = vsel %vm332, %v2337, %v2339
          %v2344 = vadd.f32 %v2325, %v2338
          %v2345 = vadd.f32 %v2326, %v2340
          %v2346 = vadd.f32 %v2327, %v2339
          %s2347 = sld [smem:[#allocation6 + $0x3e]]
          %v2348 = vstv %s2347
          %v2349 = vmul.f32 %v2348, %v289
          %v2350 = vmul.f32 %v2348, %v291
          %v2351 = vmul.f32 %v2348, %v293
          %v2355 = vrot.slane %v2349, 1
          %v2356 = vrot.slane %v2350, 1
          %v2357 = vsel %vm332, %v2355, %v2356
          %v2358 = vrot.slane %v2351, 1
          %v2359 = vsel %vm332, %v2356, %v2358
          %v2363 = vadd.f32 %v2344, %v2357
          %v2364 = vadd.f32 %v2345, %v2359
          %v2365 = vadd.f32 %v2346, %v2358
          %s2366 = sld [smem:[#allocation6 + $0x14]]
          %v2367 = vstv %s2366
          %v2368 = vmul.f32 %v2367, %v281
          %v2369 = vmul.f32 %v2367, %v283
          %v2370 = vmul.f32 %v2367, %v285
          %v2374 = vrot.slane %v2368, 2
          %v2375 = vrot.slane %v2369, 2
          %v2376 = vsel %vm405, %v2374, %v2375
          %v2377 = vrot.slane %v2370, 2
          %v2378 = vsel %vm405, %v2375, %v2377
          %v2382 = vadd.f32 %v2363, %v2376
          %v2383 = vadd.f32 %v2364, %v2378
          %v2384 = vadd.f32 %v2365, %v2377
          %s2385 = sld [smem:[#allocation6 + $0x45]]
          %v2386 = vstv %s2385
          %v2387 = vmul.f32 %v2386, %v289
          %v2388 = vmul.f32 %v2386, %v291
          %v2389 = vmul.f32 %v2386, %v293
          %v2393 = vrot.slane %v2387, 2
          %v2394 = vrot.slane %v2388, 2
          %v2395 = vsel %vm405, %v2393, %v2394
          %v2396 = vrot.slane %v2389, 2
          %v2397 = vsel %vm405, %v2394, %v2396
          %v2401 = vadd.f32 %v2382, %v2395
          %v2402 = vadd.f32 %v2383, %v2397
          %v2403 = vadd.f32 %v2384, %v2396
          %s2404 = sld [smem:[#allocation6 + $0x1b]]
          %v2405 = vstv %s2404
          %v2406 = vmul.f32 %v2405, %v283
          %v2407 = vmul.f32 %v2405, %v285
          %v2410 = vrot.slane %v2406, 3
          %v2411 = vrot.slane %v2407, 3
          %v2412 = vsel %vm474, %v2410, %v2411
          %v2416 = vadd.f32 %v2401, %v2410
          %v2417 = vadd.f32 %v2402, %v2412
          %v2418 = vadd.f32 %v2403, %v2411
          %s2419 = sld [smem:[#allocation6 + $0x4c]]
          %v2420 = vstv %s2419
          %v2421 = vmul.f32 %v2420, %v291
          %v2422 = vmul.f32 %v2420, %v293
          %v2425 = vrot.slane %v2421, 3
          %v2426 = vrot.slane %v2422, 3
          %v2427 = vsel %vm474, %v2425, %v2426
          %v2431 = vadd.f32 %v2416, %v2425
          %v2432 = vadd.f32 %v2417, %v2427
          %v2433 = vadd.f32 %v2418, %v2426
          %s2434 = sld [smem:[#allocation6 + $0x22]]
          %v2435 = vstv %s2434
          %v2436 = vmul.f32 %v2435, %v283
          %v2437 = vmul.f32 %v2435, %v285
          %v2438 = vmul.f32 %v2435, %v287
          %v2442 = vrot.slane %v2436, 4
          %v2443 = vrot.slane %v2437, 4
          %v2444 = vsel %vm535, %v2442, %v2443
          %v2445 = vrot.slane %v2438, 4
          %v2446 = vsel %vm535, %v2443, %v2445
          %v2450 = vadd.f32 %v2431, %v2442
          %v2451 = vadd.f32 %v2432, %v2444
          %v2452 = vadd.f32 %v2433, %v2446
          %s2453 = sld [smem:[#allocation6 + $0x53]]
          %v2454 = vstv %s2453
          %v2455 = vmul.f32 %v2454, %v291
          %v2456 = vmul.f32 %v2454, %v293
          %v2457 = vmul.f32 %v2454, %v295
          %v2461 = vrot.slane %v2455, 4
          %v2462 = vrot.slane %v2456, 4
          %v2463 = vsel %vm535, %v2461, %v2462
          %v2464 = vrot.slane %v2457, 4
          %v2465 = vsel %vm535, %v2462, %v2464
          %v2469 = vadd.f32 %v2450, %v2461
          %v2470 = vadd.f32 %v2451, %v2463
          %v2471 = vadd.f32 %v2452, %v2465
          %s2472 = sld [smem:[#allocation6 + $0x29]]
          %v2473 = vstv %s2472
          %v2474 = vmul.f32 %v2473, %v283
          %v2475 = vmul.f32 %v2473, %v285
          %v2476 = vmul.f32 %v2473, %v287
          %v2480 = vrot.slane %v2474, 5
          %v2481 = vrot.slane %v2475, 5
          %v2482 = vsel %vm608, %v2480, %v2481
          %v2483 = vrot.slane %v2476, 5
          %v2484 = vsel %vm608, %v2481, %v2483
          %v2488 = vadd.f32 %v2469, %v2480
          %v2489 = vadd.f32 %v2470, %v2482
          %v2490 = vadd.f32 %v2471, %v2484
          %s2491 = sld [smem:[#allocation6 + $0x5a]]
          %v2492 = vstv %s2491
          %v2493 = vmul.f32 %v2492, %v291
          %v2494 = vmul.f32 %v2492, %v293
          %v2495 = vmul.f32 %v2492, %v295
          %v2499 = vrot.slane %v2493, 5
          %v2500 = vrot.slane %v2494, 5
          %v2501 = vsel %vm608, %v2499, %v2500
          %v2502 = vrot.slane %v2495, 5
          %v2503 = vsel %vm608, %v2500, %v2502
          %v2507 = vadd.f32 %v2488, %v2499
          %v2508 = vadd.f32 %v2489, %v2501
          %v2509 = vadd.f32 %v2490, %v2503
          %s2510 = sld [smem:[#allocation6 + $0x30]]
          %v2511 = vstv %s2510
          %v2512 = vmul.f32 %v2511, %v283
          %v2513 = vmul.f32 %v2511, %v285
          %v2514 = vmul.f32 %v2511, %v287
          %v2518 = vrot.slane %v2512, 6
          %v2519 = vrot.slane %v2513, 6
          %v2520 = vsel %vm681, %v2518, %v2519
          %v2521 = vrot.slane %v2514, 6
          %v2522 = vsel %vm681, %v2519, %v2521
          %v2526 = vadd.f32 %v2507, %v2518
          %v2527 = vadd.f32 %v2508, %v2520
          %v2528 = vadd.f32 %v2509, %v2522
          %s2529 = sld [smem:[#allocation6 + $0x61]]
          %v2530 = vstv %s2529
          %v2531 = vmul.f32 %v2530, %v291
          %v2532 = vmul.f32 %v2530, %v293
          %v2533 = vmul.f32 %v2530, %v295
          %v2537 = vrot.slane %v2531, 6
          %v2538 = vrot.slane %v2532, 6
          %v2539 = vsel %vm681, %v2537, %v2538
          %v2540 = vrot.slane %v2533, 6
          %v2541 = vsel %vm681, %v2538, %v2540
          %v2545 = vadd.f32 %v2526, %v2537
          %v2546 = vadd.f32 %v2527, %v2539
          %v2547 = vadd.f32 %v2528, %v2541
          %s2548 = sld [smem:[#allocation6 + $0x62]]
          %v2549 = vstv %s2548
          %v2550 = vadd.f32 %v2549, %v734
          %v2551 = vadd.f32 %v2549, %v735
          %v2552 = vadd.f32 %v2549, %v736
          %v2553 = vadd.f32 %v2549, %v737
          %v2554 = vadd.f32 %v2549, %v738
          %v2555 = vadd.f32 %v2549, %v739
          %2562 = vrot.lane.b32.xlu0 %v1172, 127
          %v2563 = vpop.permute.xlu0 %2562
          %2564 = vrot.lane.b32.xlu0 %v1173, 127
          %v2565 = vpop.permute.xlu0 %2564
          %2566 = vrot.lane.b32.xlu0 %v1174, 127
          %v2567 = vpop.permute.xlu0 %2566
          %2568 = vrot.lane.b32.xlu0 %v1175, 127
          %v2569 = vpop.permute.xlu0 %2568
          %2570 = vrot.lane.b32.xlu0 %v1176, 127
          %v2571 = vpop.permute.xlu0 %2570
          %2572 = vrot.lane.b32.xlu0 %v1177, 127
          %v2573 = vpop.permute.xlu0 %2572
          %vm2574 = vcmask 1039360
          %v2575 = vsel %vm2574, %v2563, %v2565
          %v2576 = vsel %vm2574, %v2567, %v2569
          %v2577 = vsel %vm2574, %v2571, %v2573
          %v2584 = vadd.f32 %v2550, %v2575
          %v2585 = vadd.f32 %v2551, %v2565
          %v2586 = vadd.f32 %v2552, %v2576
          %v2587 = vadd.f32 %v2553, %v2569
          %v2588 = vadd.f32 %v2554, %v2577
          %v2589 = vadd.f32 %v2555, %v2573
          %2596 = vrot.lane.b32.xlu0 %v1610, 126
          %v2597 = vpop.permute.xlu0 %2596
          %2598 = vrot.lane.b32.xlu0 %v1611, 126
          %v2599 = vpop.permute.xlu0 %2598
          %2600 = vrot.lane.b32.xlu0 %v1612, 126
          %v2601 = vpop.permute.xlu0 %2600
          %2602 = vrot.lane.b32.xlu0 %v1613, 126
          %v2603 = vpop.permute.xlu0 %2602
          %2604 = vrot.lane.b32.xlu0 %v1614, 126
          %v2605 = vpop.permute.xlu0 %2604
          %2606 = vrot.lane.b32.xlu0 %v1615, 126
          %v2607 = vpop.permute.xlu0 %2606
          %vm2608 = vcmask 1031168
          %v2609 = vsel %vm2608, %v2597, %v2599
          %v2610 = vsel %vm2608, %v2601, %v2603
          %v2611 = vsel %vm2608, %v2605, %v2607
          %v2618 = vadd.f32 %v2584, %v2609
          %v2619 = vadd.f32 %v2585, %v2599
          %v2620 = vadd.f32 %v2586, %v2610
          %v2621 = vadd.f32 %v2587, %v2603
          %v2622 = vadd.f32 %v2588, %v2611
          %v2623 = vadd.f32 %v2589, %v2607
          %2627 = vrot.lane.b32.xlu0 %v1846, 125
          %v2628 = vpop.permute.xlu0 %2627
          %2629 = vrot.lane.b32.xlu0 %v1847, 125
          %v2630 = vpop.permute.xlu0 %2629
          %2631 = vrot.lane.b32.xlu0 %v1848, 125
          %v2632 = vpop.permute.xlu0 %2631
          %v2636 = vadd.f32 %v2618, %v2628
          %v2637 = vadd.f32 %v2619, %v2628
          %v2638 = vadd.f32 %v2620, %v2630
          %v2639 = vadd.f32 %v2621, %v2630
          %v2640 = vadd.f32 %v2622, %v2632
          %v2641 = vadd.f32 %v2623, %v2632
          %2645 = vrot.lane.b32.xlu0 %v2079, 124
          %v2646 = vpop.permute.xlu0 %2645
          %2647 = vrot.lane.b32.xlu0 %v2080, 124
          %v2648 = vpop.permute.xlu0 %2647
          %2649 = vrot.lane.b32.xlu0 %v2081, 124
          %v2650 = vpop.permute.xlu0 %2649
          %v2654 = vadd.f32 %v2636, %v2646
          %v2655 = vadd.f32 %v2637, %v2646
          %v2656 = vadd.f32 %v2638, %v2648
          %v2657 = vadd.f32 %v2639, %v2648
          %v2658 = vadd.f32 %v2640, %v2650
          %v2659 = vadd.f32 %v2641, %v2650
          %2663 = vrot.lane.b32.xlu0 %v2312, 123
          %v2664 = vpop.permute.xlu0 %2663
          %2665 = vrot.lane.b32.xlu0 %v2313, 123
          %v2666 = vpop.permute.xlu0 %2665
          %2667 = vrot.lane.b32.xlu0 %v2314, 123
          %v2668 = vpop.permute.xlu0 %2667
          %v2672 = vadd.f32 %v2654, %v2664
          %v2673 = vadd.f32 %v2655, %v2664
          %v2674 = vadd.f32 %v2656, %v2666
          %v2675 = vadd.f32 %v2657, %v2666
          %v2676 = vadd.f32 %v2658, %v2668
          %v2677 = vadd.f32 %v2659, %v2668
          %2681 = vrot.lane.b32.xlu0 %v2545, 122
          %v2682 = vpop.permute.xlu0 %2681
          %2683 = vrot.lane.b32.xlu0 %v2546, 122
          %v2684 = vpop.permute.xlu0 %2683
          %2685 = vrot.lane.b32.xlu0 %v2547, 122
          %v2686 = vpop.permute.xlu0 %2685
          %v2690 = vadd.f32 %v2672, %v2682
          %v2691 = vadd.f32 %v2673, %v2682
          %v2692 = vadd.f32 %v2674, %v2684
          %v2693 = vadd.f32 %v2675, %v2684
          %v2694 = vadd.f32 %v2676, %v2686
          %v2695 = vadd.f32 %v2677, %v2686
          %v2696 = vxor.u32 %v2690, 2147483648
          %v2697 = vxor.u32 %v2691, 2147483648
          %v2698 = vxor.u32 %v2692, 2147483648
          %v2699 = vxor.u32 %v2693, 2147483648
          %v2700 = vxor.u32 %v2694, 2147483648
          %v2701 = vxor.u32 %v2695, 2147483648
          %v2702 = vmul.f32 %v2696, 1.442695
          %v2703 = vpow.pop %v2702
          %v2704 = vmul.f32 %v2697, 1.442695
          %v2705 = vpow.pop %v2704
          %v2706 = vmul.f32 %v2698, 1.442695
          %v2707 = vpow.pop %v2706
          %v2708 = vmul.f32 %v2699, 1.442695
          %v2709 = vpow.pop %v2708
          %v2710 = vmul.f32 %v2700, 1.442695
          %v2711 = vpow.pop %v2710
          %v2712 = vmul.f32 %v2701, 1.442695
          %v2713 = vpow.pop %v2712
          %v2714 = vadd.f32 %v2703, 1.0
          %v2715 = vadd.f32 %v2705, 1.0
          %v2716 = vadd.f32 %v2707, 1.0
          %v2717 = vadd.f32 %v2709, 1.0
          %v2718 = vadd.f32 %v2711, 1.0
          %v2719 = vadd.f32 %v2713, 1.0
          %v2720 = vrcp.pop %v2714
          %v2721 = vmul.f32 1.0, %v2720
          %v2722 = vrcp.pop %v2715
          %v2723 = vmul.f32 1.0, %v2722
          %v2724 = vrcp.pop %v2716
          %v2725 = vmul.f32 1.0, %v2724
          %v2726 = vrcp.pop %v2717
          %v2727 = vmul.f32 1.0, %v2726
          %v2728 = vrcp.pop %v2718
          %v2729 = vmul.f32 1.0, %v2728
          %v2730 = vrcp.pop %v2719
          %v2731 = vmul.f32 1.0, %v2730
          %2738 = vrot.lane.b32.xlu0 %v2721, 3
          %v2739 = vpop.permute.xlu0 %2738
          %2740 = vrot.lane.b32.xlu0 %v2723, 3
          %v2741 = vpop.permute.xlu0 %2740
          %2742 = vrot.lane.b32.xlu0 %v2725, 3
          %v2743 = vpop.permute.xlu0 %2742
          %2744 = vrot.lane.b32.xlu0 %v2727, 3
          %v2745 = vpop.permute.xlu0 %2744
          %2746 = vrot.lane.b32.xlu0 %v2729, 3
          %v2747 = vpop.permute.xlu0 %2746
          %2748 = vrot.lane.b32.xlu0 %v2731, 3
          %v2749 = vpop.permute.xlu0 %2748
          %vm2750 = vcmask 23552
          %v2751 = vsel %vm2750, %v2739, %v2741
          %v2752 = vsel %vm2750, %v2743, %v2745
          %v2753 = vsel %vm2750, %v2747, %v2749
          %vm2757 = vcmask 130053
          %2758 = vst.msk [vmem:[%s190 - $0x5] sm:$0xe0] %vm2757, %v2751
          %2759 = vst.msk [vmem:[%s190 + $0x3] sm:$0xff] %vm200, %v2752
          %vm2760 = vcmask 126976
          %2761 = vst.msk [vmem:[%s190 + $0xb] sm:$0x1f] %vm2760, %v2753
        $region44: #{tpu_custom_call.1} parent=27 // pred_fallthru
          _
        %s2762 = sand.u32 %s89, 1
        %s2763 = scalar_lea.sflag [#allocation8], %s2762
        %s2764 = sand.u32 %s89, 1
        %s2765 = smul.addr %s2764, 16
        %s2766 = scalar_lea.vmem [#allocation11], %s2765
        // Predicated region
        $region45: #{tpu_custom_call.1} parent=27 // pred_check
          %p2767 = pneg %p99
        $region46: #{tpu_custom_call.1} parent=27 // pred_check_branch
          %2769 = sbr.rel (%p2767) target = $region48
        $region47: #{tpu_custom_call.1} parent=27 // pred_region
          %s2771 = ssub.s32 256, 256
          %2772 = vsyncadd %s2763, %s2771
          %s2773 = smul.addr %s24, 2
          %s2774 = smul.addr %s2773, 128
          %s2775 = scalar_lea.hbm %s2, %s2774
          %s2776 = sshll.u32 %s2766, 4
          %s2777 = int_to_ptr.vmem [resolvable:$true] %s2776
          %2782 = dma.vmem_to_hbm [thread:$0]  %s2777, 256, %s2775, %s2763, 128, 128, 8
        $region48: #{tpu_custom_call.1} parent=27 // pred_fallthru
          _
      $region28: #{tpu_custom_call.1} parent=5 // pred_fallthru
        _
      %p2783 = scmp.le.s32.totalorder 2, %s15
      // Predicated region
      $region49: #{tpu_custom_call.1} parent=5 // pred_check
        %p2784 = pneg %p2783
      $region50: #{tpu_custom_call.1} parent=5 // pred_check_branch
        %2786 = sbr.rel (%p2784) target = $region52
      $region51: #{tpu_custom_call.1} parent=5 // pred_region
        %s2787 = ssub.s32 %s15, 2
        // Predicated region
        $region53: #{tpu_custom_call.1} parent=51 // pred_check
          %p2788 = pneg %p105
        $region54: #{tpu_custom_call.1} parent=51 // pred_check_branch
          %2790 = sbr.rel (%p2788) target = $region56
        $region55: #{tpu_custom_call.1} parent=51 // pred_region
          %s2791 = sand.u32 %s90, 1
          %s2792 = scalar_lea.sflag [#allocation8], %s2791
          %s2793 = sand.u32 %s90, 1
          %s2794 = smul.addr %s2793, 16
          %s2795 = scalar_lea.vmem [#allocation11], %s2794
          %2796 = dma.done %s2792, 256
        $region56: #{tpu_custom_call.1} parent=51 // pred_fallthru
          _
      $region52: #{tpu_custom_call.1} parent=5 // pred_fallthru
        _
    $region6: #{tpu_custom_call.1} parent=1 // loop_footer
      %s19 = sadd.s32 1, %s15
    $region7: #{tpu_custom_call.1} parent=1 // loop_footer_branch
      %14 = sbr.rel target = $region3
    $region8: #{tpu_custom_call.1} parent=1 // loop_exit
      _
    %2797 = vsyncpa [#allocation7], 1
    %s2798 = scalar_lea.sflag [#allocation7], 1
    %2799 = vsyncpa %s2798, 1
    %2800 = vsyncpa [#allocation8], 1
    %s2801 = scalar_lea.sflag [#allocation8], 1
    %2802 = vsyncpa %s2801, 1
    %2803 = vsyncpa [#allocation9], 1
    %s2804 = scalar_lea.sflag [#allocation9], 1
    %2805 = vsyncpa %s2804, 1

</llo_original>
